<compile_context>
chip_gen: v7x
topology: tpu7x:2x2x1
jax: 0.10.0
libtpu: 0.0.40
codegen_flags: <defaults>
</compile_context>

<pallas_src>
import math

import jax
import jax.numpy as jnp
from jax.experimental import pallas as pl
from jax.experimental.pallas import tpu as pltpu


def _erf(x):
    # Abramowitz & Stegun 7.1.26 rational approximation (|err| < 1.5e-7),
    # built only from ops guaranteed to lower on Mosaic (exp/mul/add/select).
    p = 0.3275911
    a1, a2, a3, a4, a5 = (0.254829592, -0.284496736, 1.421413741,
                          -1.453152027, 1.061405429)
    s = jnp.where(x >= 0.0, 1.0, -1.0)
    ax = jnp.abs(x)
    t = 1.0 / (1.0 + p * ax)
    poly = ((((a5 * t + a4) * t + a3) * t + a2) * t + a1) * t
    return s * (1.0 - poly * jnp.exp(-ax * ax))


def _gelu(x):
    # Exact (erf-based) GELU, matching torch.nn.GELU() default.
    return 0.5 * x * (1.0 + _erf(x * (1.0 / math.sqrt(2.0))))


def ffn_kernel(x_ref, w1_ref, b1_ref, w2_ref, b2_ref, o_ref):
    # x_ref : (TM, D)    activation tile (compute dtype)
    # w1_ref: (D, Dh)    Linear #1 weight, (in, out) layout
    # b1_ref: (1, Dh)    Linear #1 bias (f32)
    # w2_ref: (Dh, D)    Linear #2 weight, (in, out) layout
    # b2_ref: (1, D)     Linear #2 bias (f32)
    # o_ref : (TM, D)    output tile
    x = x_ref[...]

    # Linear #1 on the MXU, f32 accumulate; bias + GELU in f32 (EUP exp).
    h = jnp.dot(x, w1_ref[...], preferred_element_type=jnp.float32)
    h = _gelu(h + b1_ref[...])

    # Linear #2 on the MXU (cast back to compute dtype for the bf16 path).
    h = h.astype(w2_ref.dtype)
    y = jnp.dot(h, w2_ref[...], preferred_element_type=jnp.float32)
    y = y + b2_ref[...]

    o_ref[...] = y.astype(o_ref.dtype)


def _round_up(n, m):
    return ((n + m - 1) // m) * m


def feedforward_spectral(x, w1, b1, w2, b2, *, tile_m=256, compute_dtype=None):
    """x: [..., dim] -> [..., dim].

    Weights are stored matmul-friendly: w1=(dim, hidden), w2=(hidden, dim),
    i.e. the transpose of nn.Linear's (out, in) layout (pure layout plumbing).
    """
    orig_shape = x.shape
    out_dtype = x.dtype
    D, Dh = w1.shape
    assert orig_shape[-1] == D and w2.shape == (Dh, D)

    M = 1
    for s in orig_shape[:-1]:
        M *= s
    x2 = x.reshape(M, D)

    cdt = compute_dtype if compute_dtype is not None else x.dtype
    tm = min(tile_m, _round_up(M, 8))
    Mp = _round_up(M, tm)
    if Mp != M:
        x2 = jnp.pad(x2, ((0, Mp - M), (0, 0)))

    x2 = x2.astype(cdt)
    w1c = w1.astype(cdt)
    w2c = w2.astype(cdt)
    b1c = b1.reshape(1, Dh).astype(jnp.float32)
    b2c = b2.reshape(1, D).astype(jnp.float32)

    grid = (Mp // tm,)

    # VMEM budget: double-buffered activation blocks + resident weights
    # + f32 intermediates, with headroom; clamped to v7x's 64 MiB ceiling.
    isz = jnp.dtype(cdt).itemsize
    blk_x = tm * D * isz
    blk_o = tm * D * jnp.dtype(out_dtype).itemsize
    wts = (D * Dh + Dh * D) * isz + (Dh + D) * 4
    interm = 8 * tm * Dh * 4
    vmem_limit = min(64 << 20, max(16 << 20, 2 * (blk_x + blk_o) + wts + interm))

    # Scheduler hint: 2 matmuls + GELU (one exp per hidden element).
    cost = pl.CostEstimate(
        flops=2 * Mp * D * Dh * 2,
        transcendentals=Mp * Dh,
        bytes_accessed=(Mp * D * (isz + jnp.dtype(out_dtype).itemsize)
                        + 2 * D * Dh * isz + (Dh + D) * 4),
    )

    out = pl.pallas_call(
        ffn_kernel,
        out_shape=jax.ShapeDtypeStruct((Mp, D), out_dtype),
        grid_spec=pltpu.PrefetchScalarGridSpec(
            num_scalar_prefetch=0,
            grid=grid,
            in_specs=[
                pl.BlockSpec((tm, D), lambda i: (i, 0)),
                pl.BlockSpec((D, Dh), lambda i: (0, 0)),
                pl.BlockSpec((1, Dh), lambda i: (0, 0)),
                pl.BlockSpec((Dh, D), lambda i: (0, 0)),
                pl.BlockSpec((1, D), lambda i: (0, 0)),
            ],
            out_specs=pl.BlockSpec((tm, D), lambda i: (i, 0)),
        ),
        compiler_params=pltpu.CompilerParams(
            dimension_semantics=("parallel",),
            vmem_limit_bytes=int(vmem_limit)),
        cost_estimate=cost,
    )(x2, w1c, b1c, w2c, b2c)

    if Mp != M:
        out = out[:M]
    return out.reshape(orig_shape)


def feedforward_ref(x, w1, b1, w2, b2):
    """Pure-JAX reference mirroring the PyTorch module (dropout p=0 => id)."""
    h = jax.nn.gelu(jnp.dot(x, w1) + b1, approximate=False)
    return jnp.dot(h, w2) + b2


if __name__ == "__main__":
    B, N = 2, 256               # batch x tokens (flattened spectral dim)
    dim, hidden_dim = 128, 256  # lane-dense channel sizes

    key = jax.random.PRNGKey(0)
    kx, k1, kb1, k2, kb2 = jax.random.split(key, 5)

    x = jax.random.normal(kx, (B, N, dim), dtype=jnp.float32)
    # nn.Linear stores (out, in); we keep the matmul-friendly transpose.
    w1 = jax.random.normal(k1, (dim, hidden_dim), jnp.float32) / math.sqrt(dim)
    b1 = 0.1 * jax.random.normal(kb1, (hidden_dim,), jnp.float32)
    w2 = jax.random.normal(k2, (hidden_dim, dim), jnp.float32) / math.sqrt(hidden_dim)
    b2 = 0.1 * jax.random.normal(kb2, (dim,), jnp.float32)

    ref = feedforward_ref(x, w1, b1, w2, b2)

    # f32 path: tight correctness check.
    out = feedforward_spectral(x, w1, b1, w2, b2)
    jax.block_until_ready(out)
    assert out.shape == x.shape
    assert jnp.allclose(out, ref, atol=1e-3, rtol=1e-3), (
        float(jnp.max(jnp.abs(out - ref))))

    # bf16 MXU path (v6e/v7x native matmul dtype; f32 accumulate + f32 GELU).
    out_bf16 = feedforward_spectral(x, w1, b1, w2, b2,
                                    compute_dtype=jnp.bfloat16)
    jax.block_until_ready(out_bf16)
    assert jnp.allclose(out_bf16, ref, atol=1e-1, rtol=1e-1), (
        float(jnp.max(jnp.abs(out_bf16 - ref))))

    print("KERNEL_OK")
</pallas_src>

<mosaic_0001>
module attributes {stable_mosaic.version = 11 : i64} {
  func.func @ffn_kernel(%arg0: i32, %arg1: memref<256x128xf32, #tpu.memory_space<vmem>>, %arg2: memref<128x256xf32, #tpu.memory_space<vmem>>, %arg3: memref<1x256xf32, #tpu.memory_space<vmem>>, %arg4: memref<256x128xf32, #tpu.memory_space<vmem>>, %arg5: memref<1x128xf32, #tpu.memory_space<vmem>>, %arg6: memref<256x128xf32, #tpu.memory_space<vmem>>) attributes {dimension_semantics = [#tpu.dimension_semantics<parallel>], iteration_bounds = array<i64: 2>, scalar_prefetch = 0 : i64, scratch_operands = 0 : i64, tpu.core_type = #tpu.core_type<tc>, window_params = [{transform_indices = @transform_0, window_bounds = array<i64: 256, 128>}, {pipeline_mode = #tpu.pipeline_mode<synchronous>, transform_indices = @transform_1, window_bounds = array<i64: 128, 256>}, {pipeline_mode = #tpu.pipeline_mode<synchronous>, transform_indices = @transform_2, window_bounds = array<i64: 1, 256>}, {pipeline_mode = #tpu.pipeline_mode<synchronous>, transform_indices = @transform_3, window_bounds = array<i64: 256, 128>}, {pipeline_mode = #tpu.pipeline_mode<synchronous>, transform_indices = @transform_4, window_bounds = array<i64: 1, 128>}, {transform_indices = @transform_5, window_bounds = array<i64: 256, 128>}]} {
    %c0 = arith.constant 0 : index
    %c0_0 = arith.constant 0 : index
    %0 = vector.load %arg1[%c0, %c0_0] : memref<256x128xf32, #tpu.memory_space<vmem>>, vector<256x128xf32>
    %c0_1 = arith.constant 0 : index
    %c0_2 = arith.constant 0 : index
    %1 = vector.load %arg2[%c0_1, %c0_2] : memref<128x256xf32, #tpu.memory_space<vmem>>, vector<128x256xf32>
    %cst = arith.constant dense<0.000000e+00> : vector<256x256xf32>
    %2 = tpu.matmul %0, %1, %cst {dimension_numbers = #tpu.dot_dimension_numbers<[1], [0], [0], [1], [0, 0, 1, 1], [], []>} : vector<256x128xf32>, vector<128x256xf32>, vector<256x256xf32> -> vector<256x256xf32>
    %c0_3 = arith.constant 0 : index
    %c0_4 = arith.constant 0 : index
    %3 = vector.load %arg3[%c0_3, %c0_4] : memref<1x256xf32, #tpu.memory_space<vmem>>, vector<1x256xf32>
    %4 = vector.broadcast %3 : vector<1x256xf32> to vector<256x256xf32>
    %5 = arith.addf %2, %4 : vector<256x256xf32>
    %cst_5 = arith.constant 5.000000e-01 : f32
    %6 = vector.broadcast %cst_5 : f32 to vector<256x256xf32>
    %7 = arith.mulf %6, %5 : vector<256x256xf32>
    %cst_6 = arith.constant 0.707106769 : f32
    %8 = vector.broadcast %cst_6 : f32 to vector<256x256xf32>
    %9 = arith.mulf %5, %8 : vector<256x256xf32>
    %cst_7 = arith.constant 0.000000e+00 : f32
    %10 = vector.broadcast %cst_7 : f32 to vector<256x256xf32>
    %11 = arith.cmpf oge, %9, %10 : vector<256x256xf32>
    %cst_8 = arith.constant 1.000000e+00 : f32
    %cst_9 = arith.constant -1.000000e+00 : f32
    %12 = vector.broadcast %cst_8 : f32 to vector<256x256xf32>
    %13 = vector.broadcast %cst_9 : f32 to vector<256x256xf32>
    %14 = arith.select %11, %12, %13 : vector<256x256xi1>, vector<256x256xf32>
    %15 = math.absf %9 : vector<256x256xf32>
    %cst_10 = arith.constant 0.327591091 : f32
    %16 = vector.broadcast %cst_10 : f32 to vector<256x256xf32>
    %17 = arith.mulf %16, %15 : vector<256x256xf32>
    %cst_11 = arith.constant 1.000000e+00 : f32
    %18 = vector.broadcast %cst_11 : f32 to vector<256x256xf32>
    %19 = arith.addf %18, %17 : vector<256x256xf32>
    %cst_12 = arith.constant 1.000000e+00 : f32
    %20 = vector.broadcast %cst_12 : f32 to vector<256x256xf32>
    %21 = arith.divf %20, %19 : vector<256x256xf32>
    %cst_13 = arith.constant 1.06140542 : f32
    %22 = vector.broadcast %cst_13 : f32 to vector<256x256xf32>
    %23 = arith.mulf %22, %21 : vector<256x256xf32>
    %cst_14 = arith.constant -1.45315206 : f32
    %24 = vector.broadcast %cst_14 : f32 to vector<256x256xf32>
    %25 = arith.addf %23, %24 : vector<256x256xf32>
    %26 = arith.mulf %25, %21 : vector<256x256xf32>
    %cst_15 = arith.constant 1.42141378 : f32
    %27 = vector.broadcast %cst_15 : f32 to vector<256x256xf32>
    %28 = arith.addf %26, %27 : vector<256x256xf32>
    %29 = arith.mulf %28, %21 : vector<256x256xf32>
    %cst_16 = arith.constant -0.284496725 : f32
    %30 = vector.broadcast %cst_16 : f32 to vector<256x256xf32>
    %31 = arith.addf %29, %30 : vector<256x256xf32>
    %32 = arith.mulf %31, %21 : vector<256x256xf32>
    %cst_17 = arith.constant 0.254829586 : f32
    %33 = vector.broadcast %cst_17 : f32 to vector<256x256xf32>
    %34 = arith.addf %32, %33 : vector<256x256xf32>
    %35 = arith.mulf %34, %21 : vector<256x256xf32>
    %cst_18 = arith.constant 0.000000e+00 : f32
    %36 = vector.broadcast %cst_18 : f32 to vector<256x256xf32>
    %37 = arith.subf %36, %15 : vector<256x256xf32>
    %38 = arith.mulf %37, %15 : vector<256x256xf32>
    %39 = math.exp %38 : vector<256x256xf32>
    %40 = arith.mulf %35, %39 : vector<256x256xf32>
    %cst_19 = arith.constant 1.000000e+00 : f32
    %41 = vector.broadcast %cst_19 : f32 to vector<256x256xf32>
    %42 = arith.subf %41, %40 : vector<256x256xf32>
    %43 = arith.mulf %14, %42 : vector<256x256xf32>
    %cst_20 = arith.constant 1.000000e+00 : f32
    %44 = vector.broadcast %cst_20 : f32 to vector<256x256xf32>
    %45 = arith.addf %44, %43 : vector<256x256xf32>
    %46 = arith.mulf %7, %45 : vector<256x256xf32>
    %c0_21 = arith.constant 0 : index
    %c0_22 = arith.constant 0 : index
    %47 = vector.load %arg4[%c0_21, %c0_22] : memref<256x128xf32, #tpu.memory_space<vmem>>, vector<256x128xf32>
    %cst_23 = arith.constant dense<0.000000e+00> : vector<256x128xf32>
    %48 = tpu.matmul %46, %47, %cst_23 {dimension_numbers = #tpu.dot_dimension_numbers<[1], [0], [0], [1], [0, 0, 1, 1], [], []>} : vector<256x256xf32>, vector<256x128xf32>, vector<256x128xf32> -> vector<256x128xf32>
    %c0_24 = arith.constant 0 : index
    %c0_25 = arith.constant 0 : index
    %49 = vector.load %arg5[%c0_24, %c0_25] : memref<1x128xf32, #tpu.memory_space<vmem>>, vector<1x128xf32>
    %50 = vector.broadcast %49 : vector<1x128xf32> to vector<256x128xf32>
    %51 = arith.addf %48, %50 : vector<256x128xf32>
    %c0_26 = arith.constant 0 : index
    %c0_27 = arith.constant 0 : index
    %52 = vector.load %arg6[%c0_26, %c0_27] : memref<256x128xf32, #tpu.memory_space<vmem>>, vector<256x128xf32>
    tpu.vector_store %arg6[%c0_26, %c0_27], %51 {strides = array<i32>} : memref<256x128xf32, #tpu.memory_space<vmem>>, vector<256x128xf32>,
    return
  }
  func.func @transform_0(%arg0: i32) -> (i32, i32) {
    %c0_i32 = arith.constant 0 : i32
    %c0_i32_0 = arith.constant 0 : i32
    return %arg0, %c0_i32 : i32, i32
  }
  func.func @transform_1(%arg0: i32) -> (i32, i32) {
    %c0_i32 = arith.constant 0 : i32
    %c0_i32_0 = arith.constant 0 : i32
    %c0_i32_1 = arith.constant 0 : i32
    return %c0_i32, %c0_i32_0 : i32, i32
  }
  func.func @transform_2(%arg0: i32) -> (i32, i32) {
    %c0_i32 = arith.constant 0 : i32
    %c0_i32_0 = arith.constant 0 : i32
    %c0_i32_1 = arith.constant 0 : i32
    return %c0_i32, %c0_i32_0 : i32, i32
  }
  func.func @transform_3(%arg0: i32) -> (i32, i32) {
    %c0_i32 = arith.constant 0 : i32
    %c0_i32_0 = arith.constant 0 : i32
    %c0_i32_1 = arith.constant 0 : i32
    return %c0_i32, %c0_i32_0 : i32, i32
  }
  func.func @transform_4(%arg0: i32) -> (i32, i32) {
    %c0_i32 = arith.constant 0 : i32
    %c0_i32_0 = arith.constant 0 : i32
    %c0_i32_1 = arith.constant 0 : i32
    return %c0_i32, %c0_i32_0 : i32, i32
  }
  func.func @transform_5(%arg0: i32) -> (i32, i32) {
    %c0_i32 = arith.constant 0 : i32
    %c0_i32_0 = arith.constant 0 : i32
    return %arg0, %c0_i32 : i32, i32
  }
}

</mosaic_0001>

<llo_original>
// kernel: tpu_custom_call.1
$region0: #{tpu_custom_call.1}
  #allocation0 [shape = 'u32[]', space=smem, size = 0x4, offset = 0x4, fixed_abs, tag = 'smem constant byte address 0x4 - core index']
  #allocation1 [shape = 'u32[144,128]{1,0:T(1,128)}', space=vmem, size = 0x12000, scoped, tag = 'internal scratch']
  %s0 = inlined_call_operand.hbm [shape: f32[512,128], index: 0, kind: input, shape index: {}]
  %s1 = inlined_call_operand.hbm [shape: f32[128,256], index: 1, kind: input, shape index: {}]
  %s2 = inlined_call_operand.vmem [shape: f32[1,256], index: 2, kind: input, shape index: {}]
  %s3 = inlined_call_operand.hbm [shape: f32[256,128], index: 3, kind: input, shape index: {}]
  %s4 = inlined_call_operand.vmem [shape: f32[1,128], index: 4, kind: input, shape index: {}]
  %s5 = inlined_call_operand.hbm [shape: f32[512,128], index: 5, kind: output, shape index: {}]
  %s6 = sld [smem:[#allocation0]]
  $region65: #{tpu_custom_call.1} parent=0
    _
  %s8 = ssub.s32 1, %s6
  %s9 = scalar_select 0, %s8, %s6
  $region1: #{tpu_custom_call.1} parent=0
    #allocation2 [shape = 'u8[262144]{0}', space=vmem, size = 0x40000, scoped, tag = 'input window, operand 0']
    #allocation3 [shape = 's32[2]{0}', space=sflag, size = 0x8, scoped, tag = 'scoped memory for tpu_custom_call.1']
    #allocation4 [shape = 's32[2]{0}', space=sflag, size = 0x8, scoped, tag = 'scoped memory for tpu_custom_call.1']
    #allocation5 [shape = 'u8[131072]{0}', space=vmem, size = 0x20000, scoped, tag = 'input window, operand 1, single buffered']
    #allocation6 [shape = 's32[1]{0}', space=sflag, size = 0x4, scoped, tag = 'scoped memory for tpu_custom_call.1']
    #allocation7 [shape = 'u8[131072]{0}', space=vmem, size = 0x20000, scoped, tag = 'input window, operand 3, single buffered']
    #allocation8 [shape = 'u8[262144]{0}', space=vmem, size = 0x40000, scoped, tag = 'output window, operand 0']
    %10 = vsyncpa [#allocation3], 0
    %s11 = scalar_lea.sflag [#allocation3], 1
    %12 = vsyncpa %s11, 0
    %13 = vsyncpa [#allocation6], 0
    %14 = vsyncpa [#allocation4], 0
    %s15 = scalar_lea.sflag [#allocation4], 1
    %16 = vsyncpa %s15, 0
    loop: start=0, step=1, limit=4
    $region2: #{tpu_custom_call.1} parent=1 // loop_pre_header
      _
    $region3: #{tpu_custom_call.1} parent=1 // loop_header
      %s18 = sphi 0, %s22
      %p19 = scmp.ge.s32.totalorder %s18, 4
      %s28 = sphi 0, %s30
      %s31 = sphi 0, %s28
      %s32 = sphi 0, %s31
      %s48 = sphi 0, %s32
      %s52 = sphi 0, %s52
      %s54 = sphi 0, %s52
      %s55 = sphi 0, %s54
      %s69 = sphi 0, %s55
      %s73 = sphi 0, %s73
      %s75 = sphi 0, %s73
      %s76 = sphi 0, %s75
      %s90 = sphi 0, %s76
      %s94 = sphi 0, %s94
      %s96 = sphi 0, %s94
      %s97 = sphi 0, %s96
      %s111 = sphi 0, %s97
      %s115 = sphi 0, %s115
      %s117 = sphi 0, %s115
      %s118 = sphi 0, %s117
      %s132 = sphi 0, %s118
      %s138 = sphi 0, %s140
      %s141 = sphi 0, %s138
      %s142 = sphi 0, %s141
      %s158 = sphi 0, %s142
    $region4: #{tpu_custom_call.1} parent=1 // loop_header_branch
      %21 = sbr.rel (%p19) target = $region8
    $region5: #{tpu_custom_call.1} parent=1 // loop_body
      %s23 = ssub.s32 %s18, 1
      %s24 = ssub.s32 %s18, 2
      %s25 = sadd.s32 %s18, 1
      %s26 = ssub.s32 %s18, %s25
      %p27 = scmp.eq.s32.totalorder %s26, 0
      %s29 = sadd.s32 %s28, 1
      %s30 = scalar_select %p27, %s28, %s29
      %p33 = pneg %p27
      %p34 = scmp.eq.s32.totalorder %s18, 1
      %p35 = por %p33, %p34
      %p36 = scmp.ne.s32.totalorder %s28, %s31
      %p37 = scmp.eq.s32.totalorder %s18, 0
      %p38 = por %p36, %p37
      %p39 = scmp.ne.s32.totalorder %s28, %s31
      %p40 = scmp.eq.s32.totalorder %s23, 1
      %p41 = por %p39, %p40
      %p42 = scmp.ne.s32.totalorder %s31, %s32
      %p43 = scmp.eq.s32.totalorder %s23, 0
      %p44 = por %p42, %p43
      %p45 = scmp.ne.s32.totalorder %s31, %s32
      %p46 = scmp.eq.s32.totalorder %s24, 1
      %p47 = por %p45, %p46
      %p49 = scmp.ne.s32.totalorder %s32, %s48
      %p50 = scmp.eq.s32.totalorder %s24, 0
      %p51 = por %p49, %p50
      %s53 = sadd.s32 %s52, 1
      %p56 = scmp.eq.s32.totalorder %s18, 1
      %p57 = scmp.ne.s32.totalorder %s52, %s54
      %p58 = scmp.eq.s32.totalorder %s18, 0
      %p59 = por %p57, %p58
      %p60 = scmp.ne.s32.totalorder %s52, %s54
      %p61 = scmp.eq.s32.totalorder %s23, 1
      %p62 = por %p60, %p61
      %p63 = scmp.ne.s32.totalorder %s54, %s55
      %p64 = scmp.eq.s32.totalorder %s23, 0
      %p65 = por %p63, %p64
      %p66 = scmp.ne.s32.totalorder %s54, %s55
      %p67 = scmp.eq.s32.totalorder %s24, 1
      %p68 = por %p66, %p67
      %p70 = scmp.ne.s32.totalorder %s55, %s69
      %p71 = scmp.eq.s32.totalorder %s24, 0
      %p72 = por %p70, %p71
      %s74 = sadd.s32 %s73, 1
      %p77 = scmp.eq.s32.totalorder %s18, 1
      %p78 = scmp.ne.s32.totalorder %s73, %s75
      %p79 = scmp.eq.s32.totalorder %s18, 0
      %p80 = por %p78, %p79
      %p81 = scmp.ne.s32.totalorder %s73, %s75
      %p82 = scmp.eq.s32.totalorder %s23, 1
      %p83 = por %p81, %p82
      %p84 = scmp.ne.s32.totalorder %s75, %s76
      %p85 = scmp.eq.s32.totalorder %s23, 0
      %p86 = por %p84, %p85
      %p87 = scmp.ne.s32.totalorder %s75, %s76
      %p88 = scmp.eq.s32.totalorder %s24, 1
      %p89 = por %p87, %p88
      %p91 = scmp.ne.s32.totalorder %s76, %s90
      %p92 = scmp.eq.s32.totalorder %s24, 0
      %p93 = por %p91, %p92
      %s95 = sadd.s32 %s94, 1
      %p98 = scmp.eq.s32.totalorder %s18, 1
      %p99 = scmp.ne.s32.totalorder %s94, %s96
      %p100 = scmp.eq.s32.totalorder %s18, 0
      %p101 = por %p99, %p100
      %p102 = scmp.ne.s32.totalorder %s94, %s96
      %p103 = scmp.eq.s32.totalorder %s23, 1
      %p104 = por %p102, %p103
      %p105 = scmp.ne.s32.totalorder %s96, %s97
      %p106 = scmp.eq.s32.totalorder %s23, 0
      %p107 = por %p105, %p106
      %p108 = scmp.ne.s32.totalorder %s96, %s97
      %p109 = scmp.eq.s32.totalorder %s24, 1
      %p110 = por %p108, %p109
      %p112 = scmp.ne.s32.totalorder %s97, %s111
      %p113 = scmp.eq.s32.totalorder %s24, 0
      %p114 = por %p112, %p113
      %s116 = sadd.s32 %s115, 1
      %p119 = scmp.eq.s32.totalorder %s18, 1
      %p120 = scmp.ne.s32.totalorder %s115, %s117
      %p121 = scmp.eq.s32.totalorder %s18, 0
      %p122 = por %p120, %p121
      %p123 = scmp.ne.s32.totalorder %s115, %s117
      %p124 = scmp.eq.s32.totalorder %s23, 1
      %p125 = por %p123, %p124
      %p126 = scmp.ne.s32.totalorder %s117, %s118
      %p127 = scmp.eq.s32.totalorder %s23, 0
      %p128 = por %p126, %p127
      %p129 = scmp.ne.s32.totalorder %s117, %s118
      %p130 = scmp.eq.s32.totalorder %s24, 1
      %p131 = por %p129, %p130
      %p133 = scmp.ne.s32.totalorder %s118, %s132
      %p134 = scmp.eq.s32.totalorder %s24, 0
      %p135 = por %p133, %p134
      %s136 = ssub.s32 %s18, %s25
      %p137 = scmp.eq.s32.totalorder %s136, 0
      %s139 = sadd.s32 %s138, 1
      %s140 = scalar_select %p137, %s138, %s139
      %p143 = pneg %p137
      %p144 = scmp.eq.s32.totalorder %s18, 1
      %p145 = por %p143, %p144
      %p146 = scmp.ne.s32.totalorder %s138, %s141
      %p147 = scmp.eq.s32.totalorder %s18, 0
      %p148 = por %p146, %p147
      %p149 = scmp.ne.s32.totalorder %s138, %s141
      %p150 = scmp.eq.s32.totalorder %s23, 1
      %p151 = por %p149, %p150
      %p152 = scmp.ne.s32.totalorder %s141, %s142
      %p153 = scmp.eq.s32.totalorder %s23, 0
      %p154 = por %p152, %p153
      %p155 = scmp.ne.s32.totalorder %s141, %s142
      %p156 = scmp.eq.s32.totalorder %s24, 1
      %p157 = por %p155, %p156
      %p159 = scmp.ne.s32.totalorder %s142, %s158
      %p160 = scmp.eq.s32.totalorder %s24, 0
      %p161 = por %p159, %p160
      %p162 = scmp.le.s32.totalorder 1, %s18
      %p163 = scmp.lt.s32.totalorder %s18, 3
      %p164 = pnand %p162, %p163
      %p165 = pneg %p164
      // Predicated region
      $region9: #{tpu_custom_call.1} parent=5 // pred_check
        _
      $region10: #{tpu_custom_call.1} parent=5 // pred_check_branch
        %167 = sbr.rel (%p164) target = $region12
      $region11: #{tpu_custom_call.1} parent=5 // pred_region
        %s168 = ssub.s32 %s18, 1
        // Predicated region
        $region13: #{tpu_custom_call.1} parent=11 // pred_check
          %p169 = pneg %p65
        $region14: #{tpu_custom_call.1} parent=11 // pred_check_branch
          %171 = sbr.rel (%p169) target = $region16
        $region15: #{tpu_custom_call.1} parent=11 // pred_region
          %s173 = ssub.s32 4096, 4096
          %174 = vsyncadd [#allocation6], %s173
          %s175 = sshll.u32 [#allocation5], 4
          %s176 = int_to_ptr.vmem [resolvable:$true] %s175
          %181 = dma.hbm_to_vmem [thread:$0]  %s1, 4096, %s176, [#allocation6], 256, 256, 16
        $region16: #{tpu_custom_call.1} parent=11 // pred_fallthru
          _
        // Predicated region
        $region17: #{tpu_custom_call.1} parent=11 // pred_check
          %p182 = pneg %p86
        $region18: #{tpu_custom_call.1} parent=11 // pred_check_branch
          %184 = sbr.rel (%p182) target = $region20
        $region19: #{tpu_custom_call.1} parent=11 // pred_region
          _
        $region20: #{tpu_custom_call.1} parent=11 // pred_fallthru
          _
        // Predicated region
        $region21: #{tpu_custom_call.1} parent=11 // pred_check
          %p185 = pneg %p107
        $region22: #{tpu_custom_call.1} parent=11 // pred_check_branch
          %187 = sbr.rel (%p185) target = $region24
        $region23: #{tpu_custom_call.1} parent=11 // pred_region
          %s189 = ssub.s32 4096, 4096
          %190 = vsyncadd [#allocation6], %s189
          %s191 = sshll.u32 [#allocation7], 4
          %s192 = int_to_ptr.vmem [resolvable:$true] %s191
          %197 = dma.hbm_to_vmem [thread:$0]  %s3, 4096, %s192, [#allocation6], 128, 128, 8
        $region24: #{tpu_custom_call.1} parent=11 // pred_fallthru
          _
        // Predicated region
        $region25: #{tpu_custom_call.1} parent=11 // pred_check
          %p198 = pneg %p128
        $region26: #{tpu_custom_call.1} parent=11 // pred_check_branch
          %200 = sbr.rel (%p198) target = $region28
        $region27: #{tpu_custom_call.1} parent=11 // pred_region
          _
        $region28: #{tpu_custom_call.1} parent=11 // pred_fallthru
          _
      $region12: #{tpu_custom_call.1} parent=5 // pred_fallthru
        _
      %p201 = scmp.lt.s32.totalorder %s18, 2
      // Predicated region
      $region29: #{tpu_custom_call.1} parent=5 // pred_check
        %p202 = pneg %p201
      $region30: #{tpu_custom_call.1} parent=5 // pred_check_branch
        %204 = sbr.rel (%p202) target = $region32
      $region31: #{tpu_custom_call.1} parent=5 // pred_region
        // Predicated region
        $region33: #{tpu_custom_call.1} parent=31 // pred_check
          %p205 = pneg %p38
        $region34: #{tpu_custom_call.1} parent=31 // pred_check_branch
          %207 = sbr.rel (%p205) target = $region36
        $region35: #{tpu_custom_call.1} parent=31 // pred_region
          %s208 = sand.u32 %s28, 1
          %s209 = scalar_lea.sflag [#allocation3], %s208
          %s210 = sand.u32 %s28, 1
          %s211 = smul.addr %s210, 256
          %s212 = scalar_lea.vmem [#allocation2], %s211
          %s213 = smul.u32 32, %s18
          %s215 = ssub.s32 4096, 4096
          %216 = vsyncadd %s209, %s215
          %s217 = smul.addr %s213, 128
          %s218 = scalar_lea.hbm %s0, %s217
          %s219 = sshll.u32 %s212, 4
          %s220 = int_to_ptr.vmem [resolvable:$true] %s219
          %225 = dma.hbm_to_vmem [thread:$0]  %s218, 4096, %s220, %s209, 128, 128, 8
        $region36: #{tpu_custom_call.1} parent=31 // pred_fallthru
          _
      $region32: #{tpu_custom_call.1} parent=5 // pred_fallthru
        _
      %p226 = scmp.le.s32.totalorder 1, %s18
      %p227 = scmp.lt.s32.totalorder %s18, 3
      %p228 = pnand %p226, %p227
      %p229 = pneg %p228
      // Predicated region
      $region37: #{tpu_custom_call.1} parent=5 // pred_check
        _
      $region38: #{tpu_custom_call.1} parent=5 // pred_check_branch
        %231 = sbr.rel (%p228) target = $region40
      $region39: #{tpu_custom_call.1} parent=5 // pred_region
        %s232 = ssub.s32 %s18, 1
        %s233 = sand.u32 %s31, 1
        %s234 = scalar_lea.sflag [#allocation3], %s233
        %s235 = sand.u32 %s31, 1
        %s236 = smul.addr %s235, 256
        %s237 = scalar_lea.vmem [#allocation2], %s236
        // Predicated region
        $region41: #{tpu_custom_call.1} parent=39 // pred_check
          %p238 = pneg %p44
        $region42: #{tpu_custom_call.1} parent=39 // pred_check_branch
          %240 = sbr.rel (%p238) target = $region44
        $region43: #{tpu_custom_call.1} parent=39 // pred_region
          %241 = dma.done %s234, 4096
        $region44: #{tpu_custom_call.1} parent=39 // pred_fallthru
          _
        // Predicated region
        $region45: #{tpu_custom_call.1} parent=39 // pred_check
          %p242 = pneg %p65
        $region46: #{tpu_custom_call.1} parent=39 // pred_check_branch
          %244 = sbr.rel (%p242) target = $region48
        $region47: #{tpu_custom_call.1} parent=39 // pred_region
          %245 = dma.done [#allocation6], 4096
        $region48: #{tpu_custom_call.1} parent=39 // pred_fallthru
          _
        // Predicated region
        $region49: #{tpu_custom_call.1} parent=39 // pred_check
          %p246 = pneg %p107
        $region50: #{tpu_custom_call.1} parent=39 // pred_check_branch
          %248 = sbr.rel (%p246) target = $region52
        $region51: #{tpu_custom_call.1} parent=39 // pred_region
          %249 = dma.done [#allocation6], 4096
        $region52: #{tpu_custom_call.1} parent=39 // pred_fallthru
          _
        %s250 = sand.u32 %s31, 1
        %s251 = scalar_lea.sflag [#allocation3], %s250
        %s252 = sand.u32 %s31, 1
        %s253 = smul.addr %s252, 256
        %s254 = scalar_lea.vmem [#allocation2], %s253
        %p255 = pneg %p44
        %p256 = pneg %p41
        %p257 = pneg %p65
        %p258 = pneg %p62
        %p259 = pneg %p86
        %p260 = pneg %p83
        %p261 = pneg %p107
        %p262 = pneg %p104
        %p263 = pneg %p128
        %p264 = pneg %p125
        %p265 = pneg %p154
        %p266 = pneg %p151
        %s267 = sand.u32 %s141, 1
        %s268 = scalar_lea.sflag [#allocation4], %s267
        %s269 = sand.u32 %s141, 1
        %s270 = smul.addr %s269, 256
        %s271 = scalar_lea.vmem [#allocation8], %s270
        %s272 = smul.u32 32, %s23
        %s273 = smul.u32 32, %s23
        %v274 = vld [vmem:[%s237] sm:$0xff]
        %v275 = vld [vmem:[%s237 + $0x8] sm:$0xff]
        %v276 = vld [vmem:[%s237 + $0x10] sm:$0xff]
        %v277 = vld [vmem:[%s237 + $0x18] sm:$0xff]
        %v278 = vld [vmem:[%s237 + $0x20] sm:$0xff]
        %v279 = vld [vmem:[%s237 + $0x28] sm:$0xff]
        %v280 = vld [vmem:[%s237 + $0x30] sm:$0xff]
        %v281 = vld [vmem:[%s237 + $0x38] sm:$0xff]
        %v282 = vld [vmem:[%s237 + $0x40] sm:$0xff]
        %v283 = vld [vmem:[%s237 + $0x48] sm:$0xff]
        %v284 = vld [vmem:[%s237 + $0x50] sm:$0xff]
        %v285 = vld [vmem:[%s237 + $0x58] sm:$0xff]
        %v286 = vld [vmem:[%s237 + $0x60] sm:$0xff]
        %v287 = vld [vmem:[%s237 + $0x68] sm:$0xff]
        %v288 = vld [vmem:[%s237 + $0x70] sm:$0xff]
        %v289 = vld [vmem:[%s237 + $0x78] sm:$0xff]
        %v290 = vld [vmem:[%s237 + $0x80] sm:$0xff]
        %v291 = vld [vmem:[%s237 + $0x88] sm:$0xff]
        %v292 = vld [vmem:[%s237 + $0x90] sm:$0xff]
        %v293 = vld [vmem:[%s237 + $0x98] sm:$0xff]
        %v294 = vld [vmem:[%s237 + $0xa0] sm:$0xff]
        %v295 = vld [vmem:[%s237 + $0xa8] sm:$0xff]
        %v296 = vld [vmem:[%s237 + $0xb0] sm:$0xff]
        %v297 = vld [vmem:[%s237 + $0xb8] sm:$0xff]
        %v298 = vld [vmem:[%s237 + $0xc0] sm:$0xff]
        %v299 = vld [vmem:[%s237 + $0xc8] sm:$0xff]
        %v300 = vld [vmem:[%s237 + $0xd0] sm:$0xff]
        %v301 = vld [vmem:[%s237 + $0xd8] sm:$0xff]
        %v302 = vld [vmem:[%s237 + $0xe0] sm:$0xff]
        %v303 = vld [vmem:[%s237 + $0xe8] sm:$0xff]
        %v304 = vld [vmem:[%s237 + $0xf0] sm:$0xff]
        %v305 = vld [vmem:[%s237 + $0xf8] sm:$0xff]
        %v306 = vld [vmem:[#allocation5] sm:$0xff]
        %v307 = vld [vmem:[#allocation5 + $0x8] sm:$0xff]
        %v308 = vld [vmem:[#allocation5 + $0x10] sm:$0xff]
        %v309 = vld [vmem:[#allocation5 + $0x18] sm:$0xff]
        %v310 = vld [vmem:[#allocation5 + $0x20] sm:$0xff]
        %v311 = vld [vmem:[#allocation5 + $0x28] sm:$0xff]
        %v312 = vld [vmem:[#allocation5 + $0x30] sm:$0xff]
        %v313 = vld [vmem:[#allocation5 + $0x38] sm:$0xff]
        %v314 = vld [vmem:[#allocation5 + $0x40] sm:$0xff]
        %v315 = vld [vmem:[#allocation5 + $0x48] sm:$0xff]
        %v316 = vld [vmem:[#allocation5 + $0x50] sm:$0xff]
        %v317 = vld [vmem:[#allocation5 + $0x58] sm:$0xff]
        %v318 = vld [vmem:[#allocation5 + $0x60] sm:$0xff]
        %v319 = vld [vmem:[#allocation5 + $0x68] sm:$0xff]
        %v320 = vld [vmem:[#allocation5 + $0x70] sm:$0xff]
        %v321 = vld [vmem:[#allocation5 + $0x78] sm:$0xff]
        %v322 = vld [vmem:[#allocation5 + $0x80] sm:$0xff]
        %v323 = vld [vmem:[#allocation5 + $0x88] sm:$0xff]
        %v324 = vld [vmem:[#allocation5 + $0x90] sm:$0xff]
        %v325 = vld [vmem:[#allocation5 + $0x98] sm:$0xff]
        %v326 = vld [vmem:[#allocation5 + $0xa0] sm:$0xff]
        %v327 = vld [vmem:[#allocation5 + $0xa8] sm:$0xff]
        %v328 = vld [vmem:[#allocation5 + $0xb0] sm:$0xff]
        %v329 = vld [vmem:[#allocation5 + $0xb8] sm:$0xff]
        %v330 = vld [vmem:[#allocation5 + $0xc0] sm:$0xff]
        %v331 = vld [vmem:[#allocation5 + $0xc8] sm:$0xff]
        %v332 = vld [vmem:[#allocation5 + $0xd0] sm:$0xff]
        %v333 = vld [vmem:[#allocation5 + $0xd8] sm:$0xff]
        %v334 = vld [vmem:[#allocation5 + $0xe0] sm:$0xff]
        %v335 = vld [vmem:[#allocation5 + $0xe8] sm:$0xff]
        %v336 = vld [vmem:[#allocation5 + $0xf0] sm:$0xff]
        %v337 = vld [vmem:[#allocation5 + $0xf8] sm:$0xff]
        %v338 = vld [vmem:[%s2] sm:$0x3]
        %v340 = vlaneseq
        %v341 = vshrl.u32 %v340, 7
        %v342 = vsub.s32 0, %v341
        %v343 = vrot.slane %v338, %v342
        %v344 = vlaneseq
        %v345 = vshrl.u32 %v344, 7
        %v346 = vsub.s32 1, %v345
        %v347 = vrot.slane %v338, %v346
        %350 = vmatprep.subr.mxu0 %v307
        %351 = vmatpush1.msra.mxu0 %v306
        %352 = vmatprep.subr.mxu0 %v309
        %353 = vmatpush1.msra.mxu0 %v308
        %354 = vmatprep.subr.mxu0 %v311
        %355 = vmatpush1.msra.mxu0 %v310
        %356 = vmatprep.subr.mxu0 %v313
        %357 = vmatpush1.msra.mxu0 %v312
        %358 = vmatprep.subr.mxu0 %v315
        %359 = vmatpush1.msra.mxu0 %v314
        %360 = vmatprep.subr.mxu0 %v317
        %361 = vmatpush1.msra.mxu0 %v316
        %362 = vmatprep.subr.mxu0 %v319
        %363 = vmatpush1.msra.mxu0 %v318
        %364 = vmatprep.subr.mxu0 %v321
        %365 = vmatpush1.msra.mxu0 %v320
        %366 = vmatprep.subr.mxu0 %v323
        %367 = vmatpush1.msra.mxu0 %v322
        %368 = vmatprep.subr.mxu0 %v325
        %369 = vmatpush1.msra.mxu0 %v324
        %370 = vmatprep.subr.mxu0 %v327
        %371 = vmatpush1.msra.mxu0 %v326
        %372 = vmatprep.subr.mxu0 %v329
        %373 = vmatpush1.msra.mxu0 %v328
        %374 = vmatprep.subr.mxu0 %v331
        %375 = vmatpush1.msra.mxu0 %v330
        %376 = vmatprep.subr.mxu0 %v333
        %377 = vmatpush1.msra.mxu0 %v332
        %378 = vmatprep.subr.mxu0 %v335
        %379 = vmatpush1.msra.mxu0 %v334
        %380 = vmatprep.subr.mxu0 %v337
        %381 = vmatpush1.msra.mxu0 %v336
        %382 = vmatprep.subr.mxu0 0.0
        %383 = vmatpush1.msra.mxu0 0.0
        %384 = vmatprep.subr.mxu0 0.0
        %385 = vmatpush1.msra.mxu0 0.0
        %386 = vmatprep.subr.mxu0 0.0
        %387 = vmatpush1.msra.mxu0 0.0
        %388 = vmatprep.subr.mxu0 0.0
        %389 = vmatpush1.msra.mxu0 0.0
        %390 = vmatprep.subr.mxu0 0.0
        %391 = vmatpush1.msra.mxu0 0.0
        %392 = vmatprep.subr.mxu0 0.0
        %393 = vmatpush1.msra.mxu0 0.0
        %394 = vmatprep.subr.mxu0 0.0
        %395 = vmatpush1.msra.mxu0 0.0
        %396 = vmatprep.subr.mxu0 0.0
        %397 = vmatpush1.msra.mxu0 0.0
        %398 = vmatprep.subr.mxu0 0.0
        %399 = vmatpush1.msra.mxu0 0.0
        %400 = vmatprep.subr.mxu0 0.0
        %401 = vmatpush1.msra.mxu0 0.0
        %402 = vmatprep.subr.mxu0 0.0
        %403 = vmatpush1.msra.mxu0 0.0
        %404 = vmatprep.subr.mxu0 0.0
        %405 = vmatpush1.msra.mxu0 0.0
        %406 = vmatprep.subr.mxu0 0.0
        %407 = vmatpush1.msra.mxu0 0.0
        %408 = vmatprep.subr.mxu0 0.0
        %409 = vmatpush1.msra.mxu0 0.0
        %410 = vmatprep.subr.mxu0 0.0
        %411 = vmatpush1.msra.mxu0 0.0
        %412 = vmatprep.subr.mxu0 0.0
        %413 = vmatpush1.msra.mxu0 0.0
        %414 = vmatprep.mubr.f32.mxu0 0.0
        %415 = vmatmul.mubr.f32.gmra.mrb[0].mxu0 %v274
        %v416 = vpop.f32.mrb[0].mxu0
        %v417 = vadd.f32 %v343, %v416
        %v418 = vpop.f32.mrb[0].mxu0
        %v419 = vadd.f32 %v347, %v418
        %420 = vmatprep.mubr.f32.mxu0 0.0
        %421 = vmatmul.mubr.f32.gmra.mrb[0].mxu0 %v275
        %v422 = vpop.f32.mrb[0].mxu0
        %v423 = vadd.f32 %v343, %v422
        %v424 = vpop.f32.mrb[0].mxu0
        %v425 = vadd.f32 %v347, %v424
        %426 = vmatprep.mubr.f32.mxu0 0.0
        %427 = vmatmul.mubr.f32.gmra.mrb[0].mxu0 %v276
        %v428 = vpop.f32.mrb[0].mxu0
        %v429 = vadd.f32 %v343, %v428
        %v430 = vpop.f32.mrb[0].mxu0
        %v431 = vadd.f32 %v347, %v430
        %432 = vmatprep.mubr.f32.mxu0 0.0
        %433 = vmatmul.mubr.f32.gmra.mrb[0].mxu0 %v277
        %v434 = vpop.f32.mrb[0].mxu0
        %v435 = vadd.f32 %v343, %v434
        %v436 = vpop.f32.mrb[0].mxu0
        %v437 = vadd.f32 %v347, %v436
        %438 = vmatprep.mubr.f32.mxu0 0.0
        %439 = vmatmul.mubr.f32.gmra.mrb[0].mxu0 %v278
        %v440 = vpop.f32.mrb[0].mxu0
        %v441 = vadd.f32 %v343, %v440
        %v442 = vpop.f32.mrb[0].mxu0
        %v443 = vadd.f32 %v347, %v442
        %444 = vmatprep.mubr.f32.mxu0 0.0
        %445 = vmatmul.mubr.f32.gmra.mrb[0].mxu0 %v279
        %v446 = vpop.f32.mrb[0].mxu0
        %v447 = vadd.f32 %v343, %v446
        %v448 = vpop.f32.mrb[0].mxu0
        %v449 = vadd.f32 %v347, %v448
        %450 = vmatprep.mubr.f32.mxu0 0.0
        %451 = vmatmul.mubr.f32.gmra.mrb[0].mxu0 %v280
        %v452 = vpop.f32.mrb[0].mxu0
        %v453 = vadd.f32 %v343, %v452
        %v454 = vpop.f32.mrb[0].mxu0
        %v455 = vadd.f32 %v347, %v454
        %456 = vmatprep.mubr.f32.mxu0 0.0
        %457 = vmatmul.mubr.f32.gmra.mrb[0].mxu0 %v281
        %v458 = vpop.f32.mrb[0].mxu0
        %v459 = vadd.f32 %v343, %v458
        %v460 = vpop.f32.mrb[0].mxu0
        %v461 = vadd.f32 %v347, %v460
        %462 = vmatprep.mubr.f32.mxu0 0.0
        %463 = vmatmul.mubr.f32.gmra.mrb[0].mxu0 %v282
        %v464 = vpop.f32.mrb[0].mxu0
        %v465 = vadd.f32 %v343, %v464
        %v466 = vpop.f32.mrb[0].mxu0
        %v467 = vadd.f32 %v347, %v466
        %468 = vmatprep.mubr.f32.mxu0 0.0
        %469 = vmatmul.mubr.f32.gmra.mrb[0].mxu0 %v283
        %v470 = vpop.f32.mrb[0].mxu0
        %v471 = vadd.f32 %v343, %v470
        %v472 = vpop.f32.mrb[0].mxu0
        %v473 = vadd.f32 %v347, %v472
        %474 = vmatprep.mubr.f32.mxu0 0.0
        %475 = vmatmul.mubr.f32.gmra.mrb[0].mxu0 %v284
        %v476 = vpop.f32.mrb[0].mxu0
        %v477 = vadd.f32 %v343, %v476
        %v478 = vpop.f32.mrb[0].mxu0
        %v479 = vadd.f32 %v347, %v478
        %480 = vmatprep.mubr.f32.mxu0 0.0
        %481 = vmatmul.mubr.f32.gmra.mrb[0].mxu0 %v285
        %v482 = vpop.f32.mrb[0].mxu0
        %v483 = vadd.f32 %v343, %v482
        %v484 = vpop.f32.mrb[0].mxu0
        %v485 = vadd.f32 %v347, %v484
        %486 = vmatprep.mubr.f32.mxu0 0.0
        %487 = vmatmul.mubr.f32.gmra.mrb[0].mxu0 %v286
        %v488 = vpop.f32.mrb[0].mxu0
        %v489 = vadd.f32 %v343, %v488
        %v490 = vpop.f32.mrb[0].mxu0
        %v491 = vadd.f32 %v347, %v490
        %492 = vmatprep.mubr.f32.mxu0 0.0
        %493 = vmatmul.mubr.f32.gmra.mrb[0].mxu0 %v287
        %v494 = vpop.f32.mrb[0].mxu0
        %v495 = vadd.f32 %v343, %v494
        %v496 = vpop.f32.mrb[0].mxu0
        %v497 = vadd.f32 %v347, %v496
        %498 = vmatprep.mubr.f32.mxu0 0.0
        %499 = vmatmul.mubr.f32.gmra.mrb[0].mxu0 %v288
        %v500 = vpop.f32.mrb[0].mxu0
        %v501 = vadd.f32 %v343, %v500
        %v502 = vpop.f32.mrb[0].mxu0
        %v503 = vadd.f32 %v347, %v502
        %504 = vmatprep.mubr.f32.mxu0 0.0
        %505 = vmatmul.mubr.f32.gmra.mrb[0].mxu0 %v289
        %v506 = vpop.f32.mrb[0].mxu0
        %v507 = vadd.f32 %v343, %v506
        %v508 = vpop.f32.mrb[0].mxu0
        %v509 = vadd.f32 %v347, %v508
        %510 = vmatprep.mubr.f32.mxu0 0.0
        %511 = vmatmul.mubr.f32.gmra.mrb[0].mxu0 %v290
        %v512 = vpop.f32.mrb[0].mxu0
        %v513 = vadd.f32 %v343, %v512
        %v514 = vpop.f32.mrb[0].mxu0
        %v515 = vadd.f32 %v347, %v514
        %516 = vmatprep.mubr.f32.mxu0 0.0
        %517 = vmatmul.mubr.f32.gmra.mrb[0].mxu0 %v291
        %v518 = vpop.f32.mrb[0].mxu0
        %v519 = vadd.f32 %v343, %v518
        %v520 = vpop.f32.mrb[0].mxu0
        %v521 = vadd.f32 %v347, %v520
        %522 = vmatprep.mubr.f32.mxu0 0.0
        %523 = vmatmul.mubr.f32.gmra.mrb[0].mxu0 %v292
        %v524 = vpop.f32.mrb[0].mxu0
        %v525 = vadd.f32 %v343, %v524
        %v526 = vpop.f32.mrb[0].mxu0
        %v527 = vadd.f32 %v347, %v526
        %528 = vmatprep.mubr.f32.mxu0 0.0
        %529 = vmatmul.mubr.f32.gmra.mrb[0].mxu0 %v293
        %v530 = vpop.f32.mrb[0].mxu0
        %v531 = vadd.f32 %v343, %v530
        %v532 = vpop.f32.mrb[0].mxu0
        %v533 = vadd.f32 %v347, %v532
        %534 = vmatprep.mubr.f32.mxu0 0.0
        %535 = vmatmul.mubr.f32.gmra.mrb[0].mxu0 %v294
        %v536 = vpop.f32.mrb[0].mxu0
        %v537 = vadd.f32 %v343, %v536
        %v538 = vpop.f32.mrb[0].mxu0
        %v539 = vadd.f32 %v347, %v538
        %540 = vmatprep.mubr.f32.mxu0 0.0
        %541 = vmatmul.mubr.f32.gmra.mrb[0].mxu0 %v295
        %v542 = vpop.f32.mrb[0].mxu0
        %v543 = vadd.f32 %v343, %v542
        %v544 = vpop.f32.mrb[0].mxu0
        %v545 = vadd.f32 %v347, %v544
        %546 = vmatprep.mubr.f32.mxu0 0.0
        %547 = vmatmul.mubr.f32.gmra.mrb[0].mxu0 %v296
        %v548 = vpop.f32.mrb[0].mxu0
        %v549 = vadd.f32 %v343, %v548
        %v550 = vpop.f32.mrb[0].mxu0
        %v551 = vadd.f32 %v347, %v550
        %552 = vmatprep.mubr.f32.mxu0 0.0
        %553 = vmatmul.mubr.f32.gmra.mrb[0].mxu0 %v297
        %v554 = vpop.f32.mrb[0].mxu0
        %v555 = vadd.f32 %v343, %v554
        %v556 = vpop.f32.mrb[0].mxu0
        %v557 = vadd.f32 %v347, %v556
        %558 = vmatprep.mubr.f32.mxu0 0.0
        %559 = vmatmul.mubr.f32.gmra.mrb[0].mxu0 %v298
        %v560 = vpop.f32.mrb[0].mxu0
        %v561 = vadd.f32 %v343, %v560
        %v562 = vpop.f32.mrb[0].mxu0
        %v563 = vadd.f32 %v347, %v562
        %564 = vmatprep.mubr.f32.mxu0 0.0
        %565 = vmatmul.mubr.f32.gmra.mrb[0].mxu0 %v299
        %v566 = vpop.f32.mrb[0].mxu0
        %v567 = vadd.f32 %v343, %v566
        %v568 = vpop.f32.mrb[0].mxu0
        %v569 = vadd.f32 %v347, %v568
        %570 = vmatprep.mubr.f32.mxu0 0.0
        %571 = vmatmul.mubr.f32.gmra.mrb[0].mxu0 %v300
        %v572 = vpop.f32.mrb[0].mxu0
        %v573 = vadd.f32 %v343, %v572
        %v574 = vpop.f32.mrb[0].mxu0
        %v575 = vadd.f32 %v347, %v574
        %576 = vmatprep.mubr.f32.mxu0 0.0
        %577 = vmatmul.mubr.f32.gmra.mrb[0].mxu0 %v301
        %v578 = vpop.f32.mrb[0].mxu0
        %v579 = vadd.f32 %v343, %v578
        %v580 = vpop.f32.mrb[0].mxu0
        %v581 = vadd.f32 %v347, %v580
        %582 = vmatprep.mubr.f32.mxu0 0.0
        %583 = vmatmul.mubr.f32.gmra.mrb[0].mxu0 %v302
        %v584 = vpop.f32.mrb[0].mxu0
        %v585 = vadd.f32 %v343, %v584
        %v586 = vpop.f32.mrb[0].mxu0
        %v587 = vadd.f32 %v347, %v586
        %588 = vmatprep.mubr.f32.mxu0 0.0
        %589 = vmatmul.mubr.f32.gmra.mrb[0].mxu0 %v303
        %v590 = vpop.f32.mrb[0].mxu0
        %v591 = vadd.f32 %v343, %v590
        %v592 = vpop.f32.mrb[0].mxu0
        %v593 = vadd.f32 %v347, %v592
        %594 = vmatprep.mubr.f32.mxu0 0.0
        %595 = vmatmul.mubr.f32.gmra.mrb[0].mxu0 %v304
        %v596 = vpop.f32.mrb[0].mxu0
        %v597 = vadd.f32 %v343, %v596
        %v598 = vpop.f32.mrb[0].mxu0
        %v599 = vadd.f32 %v347, %v598
        %600 = vmatprep.mubr.f32.mxu0 0.0
        %601 = vmatmul.mubr.f32.gmra.mrb[0].mxu0 %v305
        %v602 = vpop.f32.mrb[0].mxu0
        %v603 = vadd.f32 %v343, %v602
        %v604 = vpop.f32.mrb[0].mxu0
        %v605 = vadd.f32 %v347, %v604
        %606 = vdwg.mxu0
        %v607 = vmul.f32 %v417, 0.5
        %v608 = vmul.f32 %v419, 0.5
        %v609 = vmul.f32 %v423, 0.5
        %v610 = vmul.f32 %v425, 0.5
        %v611 = vmul.f32 %v429, 0.5
        %v612 = vmul.f32 %v431, 0.5
        %v613 = vmul.f32 %v435, 0.5
        %v614 = vmul.f32 %v437, 0.5
        %v615 = vmul.f32 %v441, 0.5
        %v616 = vmul.f32 %v443, 0.5
        %v617 = vmul.f32 %v447, 0.5
        %v618 = vmul.f32 %v449, 0.5
        %v619 = vmul.f32 %v453, 0.5
        %v620 = vmul.f32 %v455, 0.5
        %v621 = vmul.f32 %v459, 0.5
        %v622 = vmul.f32 %v461, 0.5
        %v623 = vmul.f32 %v465, 0.5
        %v624 = vmul.f32 %v467, 0.5
        %v625 = vmul.f32 %v471, 0.5
        %v626 = vmul.f32 %v473, 0.5
        %v627 = vmul.f32 %v477, 0.5
        %v628 = vmul.f32 %v479, 0.5
        %v629 = vmul.f32 %v483, 0.5
        %v630 = vmul.f32 %v485, 0.5
        %v631 = vmul.f32 %v489, 0.5
        %v632 = vmul.f32 %v491, 0.5
        %v633 = vmul.f32 %v495, 0.5
        %v634 = vmul.f32 %v497, 0.5
        %v635 = vmul.f32 %v501, 0.5
        %v636 = vmul.f32 %v503, 0.5
        %v637 = vmul.f32 %v507, 0.5
        %v638 = vmul.f32 %v509, 0.5
        %v639 = vmul.f32 %v513, 0.5
        %v640 = vmul.f32 %v515, 0.5
        %v641 = vmul.f32 %v519, 0.5
        %v642 = vmul.f32 %v521, 0.5
        %v643 = vmul.f32 %v525, 0.5
        %v644 = vmul.f32 %v527, 0.5
        %v645 = vmul.f32 %v531, 0.5
        %v646 = vmul.f32 %v533, 0.5
        %v647 = vmul.f32 %v537, 0.5
        %v648 = vmul.f32 %v539, 0.5
        %v649 = vmul.f32 %v543, 0.5
        %v650 = vmul.f32 %v545, 0.5
        %v651 = vmul.f32 %v549, 0.5
        %v652 = vmul.f32 %v551, 0.5
        %v653 = vmul.f32 %v555, 0.5
        %v654 = vmul.f32 %v557, 0.5
        %v655 = vmul.f32 %v561, 0.5
        %v656 = vmul.f32 %v563, 0.5
        %v657 = vmul.f32 %v567, 0.5
        %v658 = vmul.f32 %v569, 0.5
        %v659 = vmul.f32 %v573, 0.5
        %v660 = vmul.f32 %v575, 0.5
        %v661 = vmul.f32 %v579, 0.5
        %v662 = vmul.f32 %v581, 0.5
        %v663 = vmul.f32 %v585, 0.5
        %v664 = vmul.f32 %v587, 0.5
        %v665 = vmul.f32 %v591, 0.5
        %v666 = vmul.f32 %v593, 0.5
        %v667 = vmul.f32 %v597, 0.5
        %v668 = vmul.f32 %v599, 0.5
        %v669 = vmul.f32 %v603, 0.5
        %v670 = vmul.f32 %v605, 0.5
        %v671 = vmul.f32 %v417, 0.70710677
        %v672 = vmul.f32 %v419, 0.70710677
        %v673 = vmul.f32 %v423, 0.70710677
        %v674 = vmul.f32 %v425, 0.70710677
        %v675 = vmul.f32 %v429, 0.70710677
        %v676 = vmul.f32 %v431, 0.70710677
        %v677 = vmul.f32 %v435, 0.70710677
        %v678 = vmul.f32 %v437, 0.70710677
        %v679 = vmul.f32 %v441, 0.70710677
        %v680 = vmul.f32 %v443, 0.70710677
        %v681 = vmul.f32 %v447, 0.70710677
        %v682 = vmul.f32 %v449, 0.70710677
        %v683 = vmul.f32 %v453, 0.70710677
        %v684 = vmul.f32 %v455, 0.70710677
        %v685 = vmul.f32 %v459, 0.70710677
        %v686 = vmul.f32 %v461, 0.70710677
        %v687 = vmul.f32 %v465, 0.70710677
        %v688 = vmul.f32 %v467, 0.70710677
        %v689 = vmul.f32 %v471, 0.70710677
        %v690 = vmul.f32 %v473, 0.70710677
        %v691 = vmul.f32 %v477, 0.70710677
        %v692 = vmul.f32 %v479, 0.70710677
        %v693 = vmul.f32 %v483, 0.70710677
        %v694 = vmul.f32 %v485, 0.70710677
        %v695 = vmul.f32 %v489, 0.70710677
        %v696 = vmul.f32 %v491, 0.70710677
        %v697 = vmul.f32 %v495, 0.70710677
        %v698 = vmul.f32 %v497, 0.70710677
        %v699 = vmul.f32 %v501, 0.70710677
        %v700 = vmul.f32 %v503, 0.70710677
        %v701 = vmul.f32 %v507, 0.70710677
        %v702 = vmul.f32 %v509, 0.70710677
        %v703 = vmul.f32 %v513, 0.70710677
        %v704 = vmul.f32 %v515, 0.70710677
        %v705 = vmul.f32 %v519, 0.70710677
        %v706 = vmul.f32 %v521, 0.70710677
        %v707 = vmul.f32 %v525, 0.70710677
        %v708 = vmul.f32 %v527, 0.70710677
        %v709 = vmul.f32 %v531, 0.70710677
        %v710 = vmul.f32 %v533, 0.70710677
        %v711 = vmul.f32 %v537, 0.70710677
        %v712 = vmul.f32 %v539, 0.70710677
        %v713 = vmul.f32 %v543, 0.70710677
        %v714 = vmul.f32 %v545, 0.70710677
        %v715 = vmul.f32 %v549, 0.70710677
        %v716 = vmul.f32 %v551, 0.70710677
        %v717 = vmul.f32 %v555, 0.70710677
        %v718 = vmul.f32 %v557, 0.70710677
        %v719 = vmul.f32 %v561, 0.70710677
        %v720 = vmul.f32 %v563, 0.70710677
        %v721 = vmul.f32 %v567, 0.70710677
        %v722 = vmul.f32 %v569, 0.70710677
        %v723 = vmul.f32 %v573, 0.70710677
        %v724 = vmul.f32 %v575, 0.70710677
        %v725 = vmul.f32 %v579, 0.70710677
        %v726 = vmul.f32 %v581, 0.70710677
        %v727 = vmul.f32 %v585, 0.70710677
        %v728 = vmul.f32 %v587, 0.70710677
        %v729 = vmul.f32 %v591, 0.70710677
        %v730 = vmul.f32 %v593, 0.70710677
        %v731 = vmul.f32 %v597, 0.70710677
        %v732 = vmul.f32 %v599, 0.70710677
        %v733 = vmul.f32 %v603, 0.70710677
        %v734 = vmul.f32 %v605, 0.70710677
        %vm735 = vcmp.ge.f32.partialorder %v671, 0.0
        %vm736 = vcmp.ge.f32.partialorder %v672, 0.0
        %vm737 = vcmp.ge.f32.partialorder %v673, 0.0
        %vm738 = vcmp.ge.f32.partialorder %v674, 0.0
        %vm739 = vcmp.ge.f32.partialorder %v675, 0.0
        %vm740 = vcmp.ge.f32.partialorder %v676, 0.0
        %vm741 = vcmp.ge.f32.partialorder %v677, 0.0
        %vm742 = vcmp.ge.f32.partialorder %v678, 0.0
        %vm743 = vcmp.ge.f32.partialorder %v679, 0.0
        %vm744 = vcmp.ge.f32.partialorder %v680, 0.0
        %vm745 = vcmp.ge.f32.partialorder %v681, 0.0
        %vm746 = vcmp.ge.f32.partialorder %v682, 0.0
        %vm747 = vcmp.ge.f32.partialorder %v683, 0.0
        %vm748 = vcmp.ge.f32.partialorder %v684, 0.0
        %vm749 = vcmp.ge.f32.partialorder %v685, 0.0
        %vm750 = vcmp.ge.f32.partialorder %v686, 0.0
        %vm751 = vcmp.ge.f32.partialorder %v687, 0.0
        %vm752 = vcmp.ge.f32.partialorder %v688, 0.0
        %vm753 = vcmp.ge.f32.partialorder %v689, 0.0
        %vm754 = vcmp.ge.f32.partialorder %v690, 0.0
        %vm755 = vcmp.ge.f32.partialorder %v691, 0.0
        %vm756 = vcmp.ge.f32.partialorder %v692, 0.0
        %vm757 = vcmp.ge.f32.partialorder %v693, 0.0
        %vm758 = vcmp.ge.f32.partialorder %v694, 0.0
        %vm759 = vcmp.ge.f32.partialorder %v695, 0.0
        %vm760 = vcmp.ge.f32.partialorder %v696, 0.0
        %vm761 = vcmp.ge.f32.partialorder %v697, 0.0
        %vm762 = vcmp.ge.f32.partialorder %v698, 0.0
        %vm763 = vcmp.ge.f32.partialorder %v699, 0.0
        %vm764 = vcmp.ge.f32.partialorder %v700, 0.0
        %vm765 = vcmp.ge.f32.partialorder %v701, 0.0
        %vm766 = vcmp.ge.f32.partialorder %v702, 0.0
        %vm767 = vcmp.ge.f32.partialorder %v703, 0.0
        %vm768 = vcmp.ge.f32.partialorder %v704, 0.0
        %vm769 = vcmp.ge.f32.partialorder %v705, 0.0
        %vm770 = vcmp.ge.f32.partialorder %v706, 0.0
        %vm771 = vcmp.ge.f32.partialorder %v707, 0.0
        %vm772 = vcmp.ge.f32.partialorder %v708, 0.0
        %vm773 = vcmp.ge.f32.partialorder %v709, 0.0
        %vm774 = vcmp.ge.f32.partialorder %v710, 0.0
        %vm775 = vcmp.ge.f32.partialorder %v711, 0.0
        %vm776 = vcmp.ge.f32.partialorder %v712, 0.0
        %vm777 = vcmp.ge.f32.partialorder %v713, 0.0
        %vm778 = vcmp.ge.f32.partialorder %v714, 0.0
        %vm779 = vcmp.ge.f32.partialorder %v715, 0.0
        %vm780 = vcmp.ge.f32.partialorder %v716, 0.0
        %vm781 = vcmp.ge.f32.partialorder %v717, 0.0
        %vm782 = vcmp.ge.f32.partialorder %v718, 0.0
        %vm783 = vcmp.ge.f32.partialorder %v719, 0.0
        %vm784 = vcmp.ge.f32.partialorder %v720, 0.0
        %vm785 = vcmp.ge.f32.partialorder %v721, 0.0
        %vm786 = vcmp.ge.f32.partialorder %v722, 0.0
        %vm787 = vcmp.ge.f32.partialorder %v723, 0.0
        %vm788 = vcmp.ge.f32.partialorder %v724, 0.0
        %vm789 = vcmp.ge.f32.partialorder %v725, 0.0
        %vm790 = vcmp.ge.f32.partialorder %v726, 0.0
        %vm791 = vcmp.ge.f32.partialorder %v727, 0.0
        %vm792 = vcmp.ge.f32.partialorder %v728, 0.0
        %vm793 = vcmp.ge.f32.partialorder %v729, 0.0
        %vm794 = vcmp.ge.f32.partialorder %v730, 0.0
        %vm795 = vcmp.ge.f32.partialorder %v731, 0.0
        %vm796 = vcmp.ge.f32.partialorder %v732, 0.0
        %vm797 = vcmp.ge.f32.partialorder %v733, 0.0
        %vm798 = vcmp.ge.f32.partialorder %v734, 0.0
        %v799 = vsel %vm735, 1.0, -1.0
        %v800 = vsel %vm736, 1.0, -1.0
        %v801 = vsel %vm737, 1.0, -1.0
        %v802 = vsel %vm738, 1.0, -1.0
        %v803 = vsel %vm739, 1.0, -1.0
        %v804 = vsel %vm740, 1.0, -1.0
        %v805 = vsel %vm741, 1.0, -1.0
        %v806 = vsel %vm742, 1.0, -1.0
        %v807 = vsel %vm743, 1.0, -1.0
        %v808 = vsel %vm744, 1.0, -1.0
        %v809 = vsel %vm745, 1.0, -1.0
        %v810 = vsel %vm746, 1.0, -1.0
        %v811 = vsel %vm747, 1.0, -1.0
        %v812 = vsel %vm748, 1.0, -1.0
        %v813 = vsel %vm749, 1.0, -1.0
        %v814 = vsel %vm750, 1.0, -1.0
        %v815 = vsel %vm751, 1.0, -1.0
        %v816 = vsel %vm752, 1.0, -1.0
        %v817 = vsel %vm753, 1.0, -1.0
        %v818 = vsel %vm754, 1.0, -1.0
        %v819 = vsel %vm755, 1.0, -1.0
        %v820 = vsel %vm756, 1.0, -1.0
        %v821 = vsel %vm757, 1.0, -1.0
        %v822 = vsel %vm758, 1.0, -1.0
        %v823 = vsel %vm759, 1.0, -1.0
        %v824 = vsel %vm760, 1.0, -1.0
        %v825 = vsel %vm761, 1.0, -1.0
        %v826 = vsel %vm762, 1.0, -1.0
        %v827 = vsel %vm763, 1.0, -1.0
        %v828 = vsel %vm764, 1.0, -1.0
        %v829 = vsel %vm765, 1.0, -1.0
        %v830 = vsel %vm766, 1.0, -1.0
        %v831 = vsel %vm767, 1.0, -1.0
        %v832 = vsel %vm768, 1.0, -1.0
        %v833 = vsel %vm769, 1.0, -1.0
        %v834 = vsel %vm770, 1.0, -1.0
        %v835 = vsel %vm771, 1.0, -1.0
        %v836 = vsel %vm772, 1.0, -1.0
        %v837 = vsel %vm773, 1.0, -1.0
        %v838 = vsel %vm774, 1.0, -1.0
        %v839 = vsel %vm775, 1.0, -1.0
        %v840 = vsel %vm776, 1.0, -1.0
        %v841 = vsel %vm777, 1.0, -1.0
        %v842 = vsel %vm778, 1.0, -1.0
        %v843 = vsel %vm779, 1.0, -1.0
        %v844 = vsel %vm780, 1.0, -1.0
        %v845 = vsel %vm781, 1.0, -1.0
        %v846 = vsel %vm782, 1.0, -1.0
        %v847 = vsel %vm783, 1.0, -1.0
        %v848 = vsel %vm784, 1.0, -1.0
        %v849 = vsel %vm785, 1.0, -1.0
        %v850 = vsel %vm786, 1.0, -1.0
        %v851 = vsel %vm787, 1.0, -1.0
        %v852 = vsel %vm788, 1.0, -1.0
        %v853 = vsel %vm789, 1.0, -1.0
        %v854 = vsel %vm790, 1.0, -1.0
        %v855 = vsel %vm791, 1.0, -1.0
        %v856 = vsel %vm792, 1.0, -1.0
        %v857 = vsel %vm793, 1.0, -1.0
        %v858 = vsel %vm794, 1.0, -1.0
        %v859 = vsel %vm795, 1.0, -1.0
        %v860 = vsel %vm796, 1.0, -1.0
        %v861 = vsel %vm797, 1.0, -1.0
        %v862 = vsel %vm798, 1.0, -1.0
        %v863 = vand.u32 2147483647, %v671
        %v864 = vand.u32 2147483647, %v672
        %v865 = vand.u32 2147483647, %v673
        %v866 = vand.u32 2147483647, %v674
        %v867 = vand.u32 2147483647, %v675
        %v868 = vand.u32 2147483647, %v676
        %v869 = vand.u32 2147483647, %v677
        %v870 = vand.u32 2147483647, %v678
        %v871 = vand.u32 2147483647, %v679
        %v872 = vand.u32 2147483647, %v680
        %v873 = vand.u32 2147483647, %v681
        %v874 = vand.u32 2147483647, %v682
        %v875 = vand.u32 2147483647, %v683
        %v876 = vand.u32 2147483647, %v684
        %v877 = vand.u32 2147483647, %v685
        %v878 = vand.u32 2147483647, %v686
        %v879 = vand.u32 2147483647, %v687
        %v880 = vand.u32 2147483647, %v688
        %v881 = vand.u32 2147483647, %v689
        %v882 = vand.u32 2147483647, %v690
        %v883 = vand.u32 2147483647, %v691
        %v884 = vand.u32 2147483647, %v692
        %v885 = vand.u32 2147483647, %v693
        %v886 = vand.u32 2147483647, %v694
        %v887 = vand.u32 2147483647, %v695
        %v888 = vand.u32 2147483647, %v696
        %v889 = vand.u32 2147483647, %v697
        %v890 = vand.u32 2147483647, %v698
        %v891 = vand.u32 2147483647, %v699
        %v892 = vand.u32 2147483647, %v700
        %v893 = vand.u32 2147483647, %v701
        %v894 = vand.u32 2147483647, %v702
        %v895 = vand.u32 2147483647, %v703
        %v896 = vand.u32 2147483647, %v704
        %v897 = vand.u32 2147483647, %v705
        %v898 = vand.u32 2147483647, %v706
        %v899 = vand.u32 2147483647, %v707
        %v900 = vand.u32 2147483647, %v708
        %v901 = vand.u32 2147483647, %v709
        %v902 = vand.u32 2147483647, %v710
        %v903 = vand.u32 2147483647, %v711
        %v904 = vand.u32 2147483647, %v712
        %v905 = vand.u32 2147483647, %v713
        %v906 = vand.u32 2147483647, %v714
        %v907 = vand.u32 2147483647, %v715
        %v908 = vand.u32 2147483647, %v716
        %v909 = vand.u32 2147483647, %v717
        %v910 = vand.u32 2147483647, %v718
        %v911 = vand.u32 2147483647, %v719
        %v912 = vand.u32 2147483647, %v720
        %v913 = vand.u32 2147483647, %v721
        %v914 = vand.u32 2147483647, %v722
        %v915 = vand.u32 2147483647, %v723
        %v916 = vand.u32 2147483647, %v724
        %v917 = vand.u32 2147483647, %v725
        %v918 = vand.u32 2147483647, %v726
        %v919 = vand.u32 2147483647, %v727
        %v920 = vand.u32 2147483647, %v728
        %v921 = vand.u32 2147483647, %v729
        %v922 = vand.u32 2147483647, %v730
        %v923 = vand.u32 2147483647, %v731
        %v924 = vand.u32 2147483647, %v732
        %v925 = vand.u32 2147483647, %v733
        %v926 = vand.u32 2147483647, %v734
        %v927 = vmul.f32 %v863, 0.3275911
        %v928 = vmul.f32 %v864, 0.3275911
        %v929 = vmul.f32 %v865, 0.3275911
        %v930 = vmul.f32 %v866, 0.3275911
        %v931 = vmul.f32 %v867, 0.3275911
        %v932 = vmul.f32 %v868, 0.3275911
        %v933 = vmul.f32 %v869, 0.3275911
        %v934 = vmul.f32 %v870, 0.3275911
        %v935 = vmul.f32 %v871, 0.3275911
        %v936 = vmul.f32 %v872, 0.3275911
        %v937 = vmul.f32 %v873, 0.3275911
        %v938 = vmul.f32 %v874, 0.3275911
        %v939 = vmul.f32 %v875, 0.3275911
        %v940 = vmul.f32 %v876, 0.3275911
        %v941 = vmul.f32 %v877, 0.3275911
        %v942 = vmul.f32 %v878, 0.3275911
        %v943 = vmul.f32 %v879, 0.3275911
        %v944 = vmul.f32 %v880, 0.3275911
        %v945 = vmul.f32 %v881, 0.3275911
        %v946 = vmul.f32 %v882, 0.3275911
        %v947 = vmul.f32 %v883, 0.3275911
        %v948 = vmul.f32 %v884, 0.3275911
        %v949 = vmul.f32 %v885, 0.3275911
        %v950 = vmul.f32 %v886, 0.3275911
        %v951 = vmul.f32 %v887, 0.3275911
        %v952 = vmul.f32 %v888, 0.3275911
        %v953 = vmul.f32 %v889, 0.3275911
        %v954 = vmul.f32 %v890, 0.3275911
        %v955 = vmul.f32 %v891, 0.3275911
        %v956 = vmul.f32 %v892, 0.3275911
        %v957 = vmul.f32 %v893, 0.3275911
        %v958 = vmul.f32 %v894, 0.3275911
        %v959 = vmul.f32 %v895, 0.3275911
        %v960 = vmul.f32 %v896, 0.3275911
        %v961 = vmul.f32 %v897, 0.3275911
        %v962 = vmul.f32 %v898, 0.3275911
        %v963 = vmul.f32 %v899, 0.3275911
        %v964 = vmul.f32 %v900, 0.3275911
        %v965 = vmul.f32 %v901, 0.3275911
        %v966 = vmul.f32 %v902, 0.3275911
        %v967 = vmul.f32 %v903, 0.3275911
        %v968 = vmul.f32 %v904, 0.3275911
        %v969 = vmul.f32 %v905, 0.3275911
        %v970 = vmul.f32 %v906, 0.3275911
        %v971 = vmul.f32 %v907, 0.3275911
        %v972 = vmul.f32 %v908, 0.3275911
        %v973 = vmul.f32 %v909, 0.3275911
        %v974 = vmul.f32 %v910, 0.3275911
        %v975 = vmul.f32 %v911, 0.3275911
        %v976 = vmul.f32 %v912, 0.3275911
        %v977 = vmul.f32 %v913, 0.3275911
        %v978 = vmul.f32 %v914, 0.3275911
        %v979 = vmul.f32 %v915, 0.3275911
        %v980 = vmul.f32 %v916, 0.3275911
        %v981 = vmul.f32 %v917, 0.3275911
        %v982 = vmul.f32 %v918, 0.3275911
        %v983 = vmul.f32 %v919, 0.3275911
        %v984 = vmul.f32 %v920, 0.3275911
        %v985 = vmul.f32 %v921, 0.3275911
        %v986 = vmul.f32 %v922, 0.3275911
        %v987 = vmul.f32 %v923, 0.3275911
        %v988 = vmul.f32 %v924, 0.3275911
        %v989 = vmul.f32 %v925, 0.3275911
        %v990 = vmul.f32 %v926, 0.3275911
        %v991 = vadd.f32 %v927, 1.0
        %v992 = vadd.f32 %v928, 1.0
        %v993 = vadd.f32 %v929, 1.0
        %v994 = vadd.f32 %v930, 1.0
        %v995 = vadd.f32 %v931, 1.0
        %v996 = vadd.f32 %v932, 1.0
        %v997 = vadd.f32 %v933, 1.0
        %v998 = vadd.f32 %v934, 1.0
        %v999 = vadd.f32 %v935, 1.0
        %v1000 = vadd.f32 %v936, 1.0
        %v1001 = vadd.f32 %v937, 1.0
        %v1002 = vadd.f32 %v938, 1.0
        %v1003 = vadd.f32 %v939, 1.0
        %v1004 = vadd.f32 %v940, 1.0
        %v1005 = vadd.f32 %v941, 1.0
        %v1006 = vadd.f32 %v942, 1.0
        %v1007 = vadd.f32 %v943, 1.0
        %v1008 = vadd.f32 %v944, 1.0
        %v1009 = vadd.f32 %v945, 1.0
        %v1010 = vadd.f32 %v946, 1.0
        %v1011 = vadd.f32 %v947, 1.0
        %v1012 = vadd.f32 %v948, 1.0
        %v1013 = vadd.f32 %v949, 1.0
        %v1014 = vadd.f32 %v950, 1.0
        %v1015 = vadd.f32 %v951, 1.0
        %v1016 = vadd.f32 %v952, 1.0
        %v1017 = vadd.f32 %v953, 1.0
        %v1018 = vadd.f32 %v954, 1.0
        %v1019 = vadd.f32 %v955, 1.0
        %v1020 = vadd.f32 %v956, 1.0
        %v1021 = vadd.f32 %v957, 1.0
        %v1022 = vadd.f32 %v958, 1.0
        %v1023 = vadd.f32 %v959, 1.0
        %v1024 = vadd.f32 %v960, 1.0
        %v1025 = vadd.f32 %v961, 1.0
        %v1026 = vadd.f32 %v962, 1.0
        %v1027 = vadd.f32 %v963, 1.0
        %v1028 = vadd.f32 %v964, 1.0
        %v1029 = vadd.f32 %v965, 1.0
        %v1030 = vadd.f32 %v966, 1.0
        %v1031 = vadd.f32 %v967, 1.0
        %v1032 = vadd.f32 %v968, 1.0
        %v1033 = vadd.f32 %v969, 1.0
        %v1034 = vadd.f32 %v970, 1.0
        %v1035 = vadd.f32 %v971, 1.0
        %v1036 = vadd.f32 %v972, 1.0
        %v1037 = vadd.f32 %v973, 1.0
        %v1038 = vadd.f32 %v974, 1.0
        %v1039 = vadd.f32 %v975, 1.0
        %v1040 = vadd.f32 %v976, 1.0
        %v1041 = vadd.f32 %v977, 1.0
        %v1042 = vadd.f32 %v978, 1.0
        %v1043 = vadd.f32 %v979, 1.0
        %v1044 = vadd.f32 %v980, 1.0
        %v1045 = vadd.f32 %v981, 1.0
        %v1046 = vadd.f32 %v982, 1.0
        %v1047 = vadd.f32 %v983, 1.0
        %v1048 = vadd.f32 %v984, 1.0
        %v1049 = vadd.f32 %v985, 1.0
        %v1050 = vadd.f32 %v986, 1.0
        %v1051 = vadd.f32 %v987, 1.0
        %v1052 = vadd.f32 %v988, 1.0
        %v1053 = vadd.f32 %v989, 1.0
        %v1054 = vadd.f32 %v990, 1.0
        %v1055 = vrcp.pop %v991
        %v1056 = vmul.f32 1.0, %v1055
        %v1057 = vrcp.pop %v992
        %v1058 = vmul.f32 1.0, %v1057
        %v1059 = vrcp.pop %v993
        %v1060 = vmul.f32 1.0, %v1059
        %v1061 = vrcp.pop %v994
        %v1062 = vmul.f32 1.0, %v1061
        %v1063 = vrcp.pop %v995
        %v1064 = vmul.f32 1.0, %v1063
        %v1065 = vrcp.pop %v996
        %v1066 = vmul.f32 1.0, %v1065
        %v1067 = vrcp.pop %v997
        %v1068 = vmul.f32 1.0, %v1067
        %v1069 = vrcp.pop %v998
        %v1070 = vmul.f32 1.0, %v1069
        %v1071 = vrcp.pop %v999
        %v1072 = vmul.f32 1.0, %v1071
        %v1073 = vrcp.pop %v1000
        %v1074 = vmul.f32 1.0, %v1073
        %v1075 = vrcp.pop %v1001
        %v1076 = vmul.f32 1.0, %v1075
        %v1077 = vrcp.pop %v1002
        %v1078 = vmul.f32 1.0, %v1077
        %v1079 = vrcp.pop %v1003
        %v1080 = vmul.f32 1.0, %v1079
        %v1081 = vrcp.pop %v1004
        %v1082 = vmul.f32 1.0, %v1081
        %v1083 = vrcp.pop %v1005
        %v1084 = vmul.f32 1.0, %v1083
        %v1085 = vrcp.pop %v1006
        %v1086 = vmul.f32 1.0, %v1085
        %v1087 = vrcp.pop %v1007
        %v1088 = vmul.f32 1.0, %v1087
        %v1089 = vrcp.pop %v1008
        %v1090 = vmul.f32 1.0, %v1089
        %v1091 = vrcp.pop %v1009
        %v1092 = vmul.f32 1.0, %v1091
        %v1093 = vrcp.pop %v1010
        %v1094 = vmul.f32 1.0, %v1093
        %v1095 = vrcp.pop %v1011
        %v1096 = vmul.f32 1.0, %v1095
        %v1097 = vrcp.pop %v1012
        %v1098 = vmul.f32 1.0, %v1097
        %v1099 = vrcp.pop %v1013
        %v1100 = vmul.f32 1.0, %v1099
        %v1101 = vrcp.pop %v1014
        %v1102 = vmul.f32 1.0, %v1101
        %v1103 = vrcp.pop %v1015
        %v1104 = vmul.f32 1.0, %v1103
        %v1105 = vrcp.pop %v1016
        %v1106 = vmul.f32 1.0, %v1105
        %v1107 = vrcp.pop %v1017
        %v1108 = vmul.f32 1.0, %v1107
        %v1109 = vrcp.pop %v1018
        %v1110 = vmul.f32 1.0, %v1109
        %v1111 = vrcp.pop %v1019
        %v1112 = vmul.f32 1.0, %v1111
        %v1113 = vrcp.pop %v1020
        %v1114 = vmul.f32 1.0, %v1113
        %v1115 = vrcp.pop %v1021
        %v1116 = vmul.f32 1.0, %v1115
        %v1117 = vrcp.pop %v1022
        %v1118 = vmul.f32 1.0, %v1117
        %v1119 = vrcp.pop %v1023
        %v1120 = vmul.f32 1.0, %v1119
        %v1121 = vrcp.pop %v1024
        %v1122 = vmul.f32 1.0, %v1121
        %v1123 = vrcp.pop %v1025
        %v1124 = vmul.f32 1.0, %v1123
        %v1125 = vrcp.pop %v1026
        %v1126 = vmul.f32 1.0, %v1125
        %v1127 = vrcp.pop %v1027
        %v1128 = vmul.f32 1.0, %v1127
        %v1129 = vrcp.pop %v1028
        %v1130 = vmul.f32 1.0, %v1129
        %v1131 = vrcp.pop %v1029
        %v1132 = vmul.f32 1.0, %v1131
        %v1133 = vrcp.pop %v1030
        %v1134 = vmul.f32 1.0, %v1133
        %v1135 = vrcp.pop %v1031
        %v1136 = vmul.f32 1.0, %v1135
        %v1137 = vrcp.pop %v1032
        %v1138 = vmul.f32 1.0, %v1137
        %v1139 = vrcp.pop %v1033
        %v1140 = vmul.f32 1.0, %v1139
        %v1141 = vrcp.pop %v1034
        %v1142 = vmul.f32 1.0, %v1141
        %v1143 = vrcp.pop %v1035
        %v1144 = vmul.f32 1.0, %v1143
        %v1145 = vrcp.pop %v1036
        %v1146 = vmul.f32 1.0, %v1145
        %v1147 = vrcp.pop %v1037
        %v1148 = vmul.f32 1.0, %v1147
        %v1149 = vrcp.pop %v1038
        %v1150 = vmul.f32 1.0, %v1149
        %v1151 = vrcp.pop %v1039
        %v1152 = vmul.f32 1.0, %v1151
        %v1153 = vrcp.pop %v1040
        %v1154 = vmul.f32 1.0, %v1153
        %v1155 = vrcp.pop %v1041
        %v1156 = vmul.f32 1.0, %v1155
        %v1157 = vrcp.pop %v1042
        %v1158 = vmul.f32 1.0, %v1157
        %v1159 = vrcp.pop %v1043
        %v1160 = vmul.f32 1.0, %v1159
        %v1161 = vrcp.pop %v1044
        %v1162 = vmul.f32 1.0, %v1161
        %v1163 = vrcp.pop %v1045
        %v1164 = vmul.f32 1.0, %v1163
        %v1165 = vrcp.pop %v1046
        %v1166 = vmul.f32 1.0, %v1165
        %v1167 = vrcp.pop %v1047
        %v1168 = vmul.f32 1.0, %v1167
        %v1169 = vrcp.pop %v1048
        %v1170 = vmul.f32 1.0, %v1169
        %v1171 = vrcp.pop %v1049
        %v1172 = vmul.f32 1.0, %v1171
        %v1173 = vrcp.pop %v1050
        %v1174 = vmul.f32 1.0, %v1173
        %v1175 = vrcp.pop %v1051
        %v1176 = vmul.f32 1.0, %v1175
        %v1177 = vrcp.pop %v1052
        %v1178 = vmul.f32 1.0, %v1177
        %v1179 = vrcp.pop %v1053
        %v1180 = vmul.f32 1.0, %v1179
        %v1181 = vrcp.pop %v1054
        %v1182 = vmul.f32 1.0, %v1181
        %v1183 = vmul.f32 %v1056, 1.0614054
        %v1184 = vmul.f32 %v1058, 1.0614054
        %v1185 = vmul.f32 %v1060, 1.0614054
        %v1186 = vmul.f32 %v1062, 1.0614054
        %v1187 = vmul.f32 %v1064, 1.0614054
        %v1188 = vmul.f32 %v1066, 1.0614054
        %v1189 = vmul.f32 %v1068, 1.0614054
        %v1190 = vmul.f32 %v1070, 1.0614054
        %v1191 = vmul.f32 %v1072, 1.0614054
        %v1192 = vmul.f32 %v1074, 1.0614054
        %v1193 = vmul.f32 %v1076, 1.0614054
        %v1194 = vmul.f32 %v1078, 1.0614054
        %v1195 = vmul.f32 %v1080, 1.0614054
        %v1196 = vmul.f32 %v1082, 1.0614054
        %v1197 = vmul.f32 %v1084, 1.0614054
        %v1198 = vmul.f32 %v1086, 1.0614054
        %v1199 = vmul.f32 %v1088, 1.0614054
        %v1200 = vmul.f32 %v1090, 1.0614054
        %v1201 = vmul.f32 %v1092, 1.0614054
        %v1202 = vmul.f32 %v1094, 1.0614054
        %v1203 = vmul.f32 %v1096, 1.0614054
        %v1204 = vmul.f32 %v1098, 1.0614054
        %v1205 = vmul.f32 %v1100, 1.0614054
        %v1206 = vmul.f32 %v1102, 1.0614054
        %v1207 = vmul.f32 %v1104, 1.0614054
        %v1208 = vmul.f32 %v1106, 1.0614054
        %v1209 = vmul.f32 %v1108, 1.0614054
        %v1210 = vmul.f32 %v1110, 1.0614054
        %v1211 = vmul.f32 %v1112, 1.0614054
        %v1212 = vmul.f32 %v1114, 1.0614054
        %v1213 = vmul.f32 %v1116, 1.0614054
        %v1214 = vmul.f32 %v1118, 1.0614054
        %v1215 = vmul.f32 %v1120, 1.0614054
        %v1216 = vmul.f32 %v1122, 1.0614054
        %v1217 = vmul.f32 %v1124, 1.0614054
        %v1218 = vmul.f32 %v1126, 1.0614054
        %v1219 = vmul.f32 %v1128, 1.0614054
        %v1220 = vmul.f32 %v1130, 1.0614054
        %v1221 = vmul.f32 %v1132, 1.0614054
        %v1222 = vmul.f32 %v1134, 1.0614054
        %v1223 = vmul.f32 %v1136, 1.0614054
        %v1224 = vmul.f32 %v1138, 1.0614054
        %v1225 = vmul.f32 %v1140, 1.0614054
        %v1226 = vmul.f32 %v1142, 1.0614054
        %v1227 = vmul.f32 %v1144, 1.0614054
        %v1228 = vmul.f32 %v1146, 1.0614054
        %v1229 = vmul.f32 %v1148, 1.0614054
        %v1230 = vmul.f32 %v1150, 1.0614054
        %v1231 = vmul.f32 %v1152, 1.0614054
        %v1232 = vmul.f32 %v1154, 1.0614054
        %v1233 = vmul.f32 %v1156, 1.0614054
        %v1234 = vmul.f32 %v1158, 1.0614054
        %v1235 = vmul.f32 %v1160, 1.0614054
        %v1236 = vmul.f32 %v1162, 1.0614054
        %v1237 = vmul.f32 %v1164, 1.0614054
        %v1238 = vmul.f32 %v1166, 1.0614054
        %v1239 = vmul.f32 %v1168, 1.0614054
        %v1240 = vmul.f32 %v1170, 1.0614054
        %v1241 = vmul.f32 %v1172, 1.0614054
        %v1242 = vmul.f32 %v1174, 1.0614054
        %v1243 = vmul.f32 %v1176, 1.0614054
        %v1244 = vmul.f32 %v1178, 1.0614054
        %v1245 = vmul.f32 %v1180, 1.0614054
        %v1246 = vmul.f32 %v1182, 1.0614054
        %v1247 = vadd.f32 %v1183, -1.4531521
        %v1248 = vadd.f32 %v1184, -1.4531521
        %v1249 = vadd.f32 %v1185, -1.4531521
        %v1250 = vadd.f32 %v1186, -1.4531521
        %v1251 = vadd.f32 %v1187, -1.4531521
        %v1252 = vadd.f32 %v1188, -1.4531521
        %v1253 = vadd.f32 %v1189, -1.4531521
        %v1254 = vadd.f32 %v1190, -1.4531521
        %v1255 = vadd.f32 %v1191, -1.4531521
        %v1256 = vadd.f32 %v1192, -1.4531521
        %v1257 = vadd.f32 %v1193, -1.4531521
        %v1258 = vadd.f32 %v1194, -1.4531521
        %v1259 = vadd.f32 %v1195, -1.4531521
        %v1260 = vadd.f32 %v1196, -1.4531521
        %v1261 = vadd.f32 %v1197, -1.4531521
        %v1262 = vadd.f32 %v1198, -1.4531521
        %v1263 = vadd.f32 %v1199, -1.4531521
        %v1264 = vadd.f32 %v1200, -1.4531521
        %v1265 = vadd.f32 %v1201, -1.4531521
        %v1266 = vadd.f32 %v1202, -1.4531521
        %v1267 = vadd.f32 %v1203, -1.4531521
        %v1268 = vadd.f32 %v1204, -1.4531521
        %v1269 = vadd.f32 %v1205, -1.4531521
        %v1270 = vadd.f32 %v1206, -1.4531521
        %v1271 = vadd.f32 %v1207, -1.4531521
        %v1272 = vadd.f32 %v1208, -1.4531521
        %v1273 = vadd.f32 %v1209, -1.4531521
        %v1274 = vadd.f32 %v1210, -1.4531521
        %v1275 = vadd.f32 %v1211, -1.4531521
        %v1276 = vadd.f32 %v1212, -1.4531521
        %v1277 = vadd.f32 %v1213, -1.4531521
        %v1278 = vadd.f32 %v1214, -1.4531521
        %v1279 = vadd.f32 %v1215, -1.4531521
        %v1280 = vadd.f32 %v1216, -1.4531521
        %v1281 = vadd.f32 %v1217, -1.4531521
        %v1282 = vadd.f32 %v1218, -1.4531521
        %v1283 = vadd.f32 %v1219, -1.4531521
        %v1284 = vadd.f32 %v1220, -1.4531521
        %v1285 = vadd.f32 %v1221, -1.4531521
        %v1286 = vadd.f32 %v1222, -1.4531521
        %v1287 = vadd.f32 %v1223, -1.4531521
        %v1288 = vadd.f32 %v1224, -1.4531521
        %v1289 = vadd.f32 %v1225, -1.4531521
        %v1290 = vadd.f32 %v1226, -1.4531521
        %v1291 = vadd.f32 %v1227, -1.4531521
        %v1292 = vadd.f32 %v1228, -1.4531521
        %v1293 = vadd.f32 %v1229, -1.4531521
        %v1294 = vadd.f32 %v1230, -1.4531521
        %v1295 = vadd.f32 %v1231, -1.4531521
        %v1296 = vadd.f32 %v1232, -1.4531521
        %v1297 = vadd.f32 %v1233, -1.4531521
        %v1298 = vadd.f32 %v1234, -1.4531521
        %v1299 = vadd.f32 %v1235, -1.4531521
        %v1300 = vadd.f32 %v1236, -1.4531521
        %v1301 = vadd.f32 %v1237, -1.4531521
        %v1302 = vadd.f32 %v1238, -1.4531521
        %v1303 = vadd.f32 %v1239, -1.4531521
        %v1304 = vadd.f32 %v1240, -1.4531521
        %v1305 = vadd.f32 %v1241, -1.4531521
        %v1306 = vadd.f32 %v1242, -1.4531521
        %v1307 = vadd.f32 %v1243, -1.4531521
        %v1308 = vadd.f32 %v1244, -1.4531521
        %v1309 = vadd.f32 %v1245, -1.4531521
        %v1310 = vadd.f32 %v1246, -1.4531521
        %v1311 = vmul.f32 %v1247, %v1056
        %v1312 = vmul.f32 %v1248, %v1058
        %v1313 = vmul.f32 %v1249, %v1060
        %v1314 = vmul.f32 %v1250, %v1062
        %v1315 = vmul.f32 %v1251, %v1064
        %v1316 = vmul.f32 %v1252, %v1066
        %v1317 = vmul.f32 %v1253, %v1068
        %v1318 = vmul.f32 %v1254, %v1070
        %v1319 = vmul.f32 %v1255, %v1072
        %v1320 = vmul.f32 %v1256, %v1074
        %v1321 = vmul.f32 %v1257, %v1076
        %v1322 = vmul.f32 %v1258, %v1078
        %v1323 = vmul.f32 %v1259, %v1080
        %v1324 = vmul.f32 %v1260, %v1082
        %v1325 = vmul.f32 %v1261, %v1084
        %v1326 = vmul.f32 %v1262, %v1086
        %v1327 = vmul.f32 %v1263, %v1088
        %v1328 = vmul.f32 %v1264, %v1090
        %v1329 = vmul.f32 %v1265, %v1092
        %v1330 = vmul.f32 %v1266, %v1094
        %v1331 = vmul.f32 %v1267, %v1096
        %v1332 = vmul.f32 %v1268, %v1098
        %v1333 = vmul.f32 %v1269, %v1100
        %v1334 = vmul.f32 %v1270, %v1102
        %v1335 = vmul.f32 %v1271, %v1104
        %v1336 = vmul.f32 %v1272, %v1106
        %v1337 = vmul.f32 %v1273, %v1108
        %v1338 = vmul.f32 %v1274, %v1110
        %v1339 = vmul.f32 %v1275, %v1112
        %v1340 = vmul.f32 %v1276, %v1114
        %v1341 = vmul.f32 %v1277, %v1116
        %v1342 = vmul.f32 %v1278, %v1118
        %v1343 = vmul.f32 %v1279, %v1120
        %v1344 = vmul.f32 %v1280, %v1122
        %v1345 = vmul.f32 %v1281, %v1124
        %v1346 = vmul.f32 %v1282, %v1126
        %v1347 = vmul.f32 %v1283, %v1128
        %v1348 = vmul.f32 %v1284, %v1130
        %v1349 = vmul.f32 %v1285, %v1132
        %v1350 = vmul.f32 %v1286, %v1134
        %v1351 = vmul.f32 %v1287, %v1136
        %v1352 = vmul.f32 %v1288, %v1138
        %v1353 = vmul.f32 %v1289, %v1140
        %v1354 = vmul.f32 %v1290, %v1142
        %v1355 = vmul.f32 %v1291, %v1144
        %v1356 = vmul.f32 %v1292, %v1146
        %v1357 = vmul.f32 %v1293, %v1148
        %v1358 = vmul.f32 %v1294, %v1150
        %v1359 = vmul.f32 %v1295, %v1152
        %v1360 = vmul.f32 %v1296, %v1154
        %v1361 = vmul.f32 %v1297, %v1156
        %v1362 = vmul.f32 %v1298, %v1158
        %v1363 = vmul.f32 %v1299, %v1160
        %v1364 = vmul.f32 %v1300, %v1162
        %v1365 = vmul.f32 %v1301, %v1164
        %v1366 = vmul.f32 %v1302, %v1166
        %v1367 = vmul.f32 %v1303, %v1168
        %v1368 = vmul.f32 %v1304, %v1170
        %v1369 = vmul.f32 %v1305, %v1172
        %v1370 = vmul.f32 %v1306, %v1174
        %v1371 = vmul.f32 %v1307, %v1176
        %v1372 = vmul.f32 %v1308, %v1178
        %v1373 = vmul.f32 %v1309, %v1180
        %v1374 = vmul.f32 %v1310, %v1182
        %v1375 = vadd.f32 %v1311, 1.4214138
        %v1376 = vadd.f32 %v1312, 1.4214138
        %v1377 = vadd.f32 %v1313, 1.4214138
        %v1378 = vadd.f32 %v1314, 1.4214138
        %v1379 = vadd.f32 %v1315, 1.4214138
        %v1380 = vadd.f32 %v1316, 1.4214138
        %v1381 = vadd.f32 %v1317, 1.4214138
        %v1382 = vadd.f32 %v1318, 1.4214138
        %v1383 = vadd.f32 %v1319, 1.4214138
        %v1384 = vadd.f32 %v1320, 1.4214138
        %v1385 = vadd.f32 %v1321, 1.4214138
        %v1386 = vadd.f32 %v1322, 1.4214138
        %v1387 = vadd.f32 %v1323, 1.4214138
        %v1388 = vadd.f32 %v1324, 1.4214138
        %v1389 = vadd.f32 %v1325, 1.4214138
        %v1390 = vadd.f32 %v1326, 1.4214138
        %v1391 = vadd.f32 %v1327, 1.4214138
        %v1392 = vadd.f32 %v1328, 1.4214138
        %v1393 = vadd.f32 %v1329, 1.4214138
        %v1394 = vadd.f32 %v1330, 1.4214138
        %v1395 = vadd.f32 %v1331, 1.4214138
        %v1396 = vadd.f32 %v1332, 1.4214138
        %v1397 = vadd.f32 %v1333, 1.4214138
        %v1398 = vadd.f32 %v1334, 1.4214138
        %v1399 = vadd.f32 %v1335, 1.4214138
        %v1400 = vadd.f32 %v1336, 1.4214138
        %v1401 = vadd.f32 %v1337, 1.4214138
        %v1402 = vadd.f32 %v1338, 1.4214138
        %v1403 = vadd.f32 %v1339, 1.4214138
        %v1404 = vadd.f32 %v1340, 1.4214138
        %v1405 = vadd.f32 %v1341, 1.4214138
        %v1406 = vadd.f32 %v1342, 1.4214138
        %v1407 = vadd.f32 %v1343, 1.4214138
        %v1408 = vadd.f32 %v1344, 1.4214138
        %v1409 = vadd.f32 %v1345, 1.4214138
        %v1410 = vadd.f32 %v1346, 1.4214138
        %v1411 = vadd.f32 %v1347, 1.4214138
        %v1412 = vadd.f32 %v1348, 1.4214138
        %v1413 = vadd.f32 %v1349, 1.4214138
        %v1414 = vadd.f32 %v1350, 1.4214138
        %v1415 = vadd.f32 %v1351, 1.4214138
        %v1416 = vadd.f32 %v1352, 1.4214138
        %v1417 = vadd.f32 %v1353, 1.4214138
        %v1418 = vadd.f32 %v1354, 1.4214138
        %v1419 = vadd.f32 %v1355, 1.4214138
        %v1420 = vadd.f32 %v1356, 1.4214138
        %v1421 = vadd.f32 %v1357, 1.4214138
        %v1422 = vadd.f32 %v1358, 1.4214138
        %v1423 = vadd.f32 %v1359, 1.4214138
        %v1424 = vadd.f32 %v1360, 1.4214138
        %v1425 = vadd.f32 %v1361, 1.4214138
        %v1426 = vadd.f32 %v1362, 1.4214138
        %v1427 = vadd.f32 %v1363, 1.4214138
        %v1428 = vadd.f32 %v1364, 1.4214138
        %v1429 = vadd.f32 %v1365, 1.4214138
        %v1430 = vadd.f32 %v1366, 1.4214138
        %v1431 = vadd.f32 %v1367, 1.4214138
        %v1432 = vadd.f32 %v1368, 1.4214138
        %v1433 = vadd.f32 %v1369, 1.4214138
        %v1434 = vadd.f32 %v1370, 1.4214138
        %v1435 = vadd.f32 %v1371, 1.4214138
        %v1436 = vadd.f32 %v1372, 1.4214138
        %v1437 = vadd.f32 %v1373, 1.4214138
        %v1438 = vadd.f32 %v1374, 1.4214138
        %v1439 = vmul.f32 %v1375, %v1056
        %v1440 = vmul.f32 %v1376, %v1058
        %v1441 = vmul.f32 %v1377, %v1060
        %v1442 = vmul.f32 %v1378, %v1062
        %v1443 = vmul.f32 %v1379, %v1064
        %v1444 = vmul.f32 %v1380, %v1066
        %v1445 = vmul.f32 %v1381, %v1068
        %v1446 = vmul.f32 %v1382, %v1070
        %v1447 = vmul.f32 %v1383, %v1072
        %v1448 = vmul.f32 %v1384, %v1074
        %v1449 = vmul.f32 %v1385, %v1076
        %v1450 = vmul.f32 %v1386, %v1078
        %v1451 = vmul.f32 %v1387, %v1080
        %v1452 = vmul.f32 %v1388, %v1082
        %v1453 = vmul.f32 %v1389, %v1084
        %v1454 = vmul.f32 %v1390, %v1086
        %v1455 = vmul.f32 %v1391, %v1088
        %v1456 = vmul.f32 %v1392, %v1090
        %v1457 = vmul.f32 %v1393, %v1092
        %v1458 = vmul.f32 %v1394, %v1094
        %v1459 = vmul.f32 %v1395, %v1096
        %v1460 = vmul.f32 %v1396, %v1098
        %v1461 = vmul.f32 %v1397, %v1100
        %v1462 = vmul.f32 %v1398, %v1102
        %v1463 = vmul.f32 %v1399, %v1104
        %v1464 = vmul.f32 %v1400, %v1106
        %v1465 = vmul.f32 %v1401, %v1108
        %v1466 = vmul.f32 %v1402, %v1110
        %v1467 = vmul.f32 %v1403, %v1112
        %v1468 = vmul.f32 %v1404, %v1114
        %v1469 = vmul.f32 %v1405, %v1116
        %v1470 = vmul.f32 %v1406, %v1118
        %v1471 = vmul.f32 %v1407, %v1120
        %v1472 = vmul.f32 %v1408, %v1122
        %v1473 = vmul.f32 %v1409, %v1124
        %v1474 = vmul.f32 %v1410, %v1126
        %v1475 = vmul.f32 %v1411, %v1128
        %v1476 = vmul.f32 %v1412, %v1130
        %v1477 = vmul.f32 %v1413, %v1132
        %v1478 = vmul.f32 %v1414, %v1134
        %v1479 = vmul.f32 %v1415, %v1136
        %v1480 = vmul.f32 %v1416, %v1138
        %v1481 = vmul.f32 %v1417, %v1140
        %v1482 = vmul.f32 %v1418, %v1142
        %v1483 = vmul.f32 %v1419, %v1144
        %v1484 = vmul.f32 %v1420, %v1146
        %v1485 = vmul.f32 %v1421, %v1148
        %v1486 = vmul.f32 %v1422, %v1150
        %v1487 = vmul.f32 %v1423, %v1152
        %v1488 = vmul.f32 %v1424, %v1154
        %v1489 = vmul.f32 %v1425, %v1156
        %v1490 = vmul.f32 %v1426, %v1158
        %v1491 = vmul.f32 %v1427, %v1160
        %v1492 = vmul.f32 %v1428, %v1162
        %v1493 = vmul.f32 %v1429, %v1164
        %v1494 = vmul.f32 %v1430, %v1166
        %v1495 = vmul.f32 %v1431, %v1168
        %v1496 = vmul.f32 %v1432, %v1170
        %v1497 = vmul.f32 %v1433, %v1172
        %v1498 = vmul.f32 %v1434, %v1174
        %v1499 = vmul.f32 %v1435, %v1176
        %v1500 = vmul.f32 %v1436, %v1178
        %v1501 = vmul.f32 %v1437, %v1180
        %v1502 = vmul.f32 %v1438, %v1182
        %v1503 = vadd.f32 %v1439, -0.28449672
        %v1504 = vadd.f32 %v1440, -0.28449672
        %v1505 = vadd.f32 %v1441, -0.28449672
        %v1506 = vadd.f32 %v1442, -0.28449672
        %v1507 = vadd.f32 %v1443, -0.28449672
        %v1508 = vadd.f32 %v1444, -0.28449672
        %v1509 = vadd.f32 %v1445, -0.28449672
        %v1510 = vadd.f32 %v1446, -0.28449672
        %v1511 = vadd.f32 %v1447, -0.28449672
        %v1512 = vadd.f32 %v1448, -0.28449672
        %v1513 = vadd.f32 %v1449, -0.28449672
        %v1514 = vadd.f32 %v1450, -0.28449672
        %v1515 = vadd.f32 %v1451, -0.28449672
        %v1516 = vadd.f32 %v1452, -0.28449672
        %v1517 = vadd.f32 %v1453, -0.28449672
        %v1518 = vadd.f32 %v1454, -0.28449672
        %v1519 = vadd.f32 %v1455, -0.28449672
        %v1520 = vadd.f32 %v1456, -0.28449672
        %v1521 = vadd.f32 %v1457, -0.28449672
        %v1522 = vadd.f32 %v1458, -0.28449672
        %v1523 = vadd.f32 %v1459, -0.28449672
        %v1524 = vadd.f32 %v1460, -0.28449672
        %v1525 = vadd.f32 %v1461, -0.28449672
        %v1526 = vadd.f32 %v1462, -0.28449672
        %v1527 = vadd.f32 %v1463, -0.28449672
        %v1528 = vadd.f32 %v1464, -0.28449672
        %v1529 = vadd.f32 %v1465, -0.28449672
        %v1530 = vadd.f32 %v1466, -0.28449672
        %v1531 = vadd.f32 %v1467, -0.28449672
        %v1532 = vadd.f32 %v1468, -0.28449672
        %v1533 = vadd.f32 %v1469, -0.28449672
        %v1534 = vadd.f32 %v1470, -0.28449672
        %v1535 = vadd.f32 %v1471, -0.28449672
        %v1536 = vadd.f32 %v1472, -0.28449672
        %v1537 = vadd.f32 %v1473, -0.28449672
        %v1538 = vadd.f32 %v1474, -0.28449672
        %v1539 = vadd.f32 %v1475, -0.28449672
        %v1540 = vadd.f32 %v1476, -0.28449672
        %v1541 = vadd.f32 %v1477, -0.28449672
        %v1542 = vadd.f32 %v1478, -0.28449672
        %v1543 = vadd.f32 %v1479, -0.28449672
        %v1544 = vadd.f32 %v1480, -0.28449672
        %v1545 = vadd.f32 %v1481, -0.28449672
        %v1546 = vadd.f32 %v1482, -0.28449672
        %v1547 = vadd.f32 %v1483, -0.28449672
        %v1548 = vadd.f32 %v1484, -0.28449672
        %v1549 = vadd.f32 %v1485, -0.28449672
        %v1550 = vadd.f32 %v1486, -0.28449672
        %v1551 = vadd.f32 %v1487, -0.28449672
        %v1552 = vadd.f32 %v1488, -0.28449672
        %v1553 = vadd.f32 %v1489, -0.28449672
        %v1554 = vadd.f32 %v1490, -0.28449672
        %v1555 = vadd.f32 %v1491, -0.28449672
        %v1556 = vadd.f32 %v1492, -0.28449672
        %v1557 = vadd.f32 %v1493, -0.28449672
        %v1558 = vadd.f32 %v1494, -0.28449672
        %v1559 = vadd.f32 %v1495, -0.28449672
        %v1560 = vadd.f32 %v1496, -0.28449672
        %v1561 = vadd.f32 %v1497, -0.28449672
        %v1562 = vadd.f32 %v1498, -0.28449672
        %v1563 = vadd.f32 %v1499, -0.28449672
        %v1564 = vadd.f32 %v1500, -0.28449672
        %v1565 = vadd.f32 %v1501, -0.28449672
        %v1566 = vadd.f32 %v1502, -0.28449672
        %v1567 = vmul.f32 %v1503, %v1056
        %v1568 = vmul.f32 %v1504, %v1058
        %v1569 = vmul.f32 %v1505, %v1060
        %v1570 = vmul.f32 %v1506, %v1062
        %v1571 = vmul.f32 %v1507, %v1064
        %v1572 = vmul.f32 %v1508, %v1066
        %v1573 = vmul.f32 %v1509, %v1068
        %v1574 = vmul.f32 %v1510, %v1070
        %v1575 = vmul.f32 %v1511, %v1072
        %v1576 = vmul.f32 %v1512, %v1074
        %v1577 = vmul.f32 %v1513, %v1076
        %v1578 = vmul.f32 %v1514, %v1078
        %v1579 = vmul.f32 %v1515, %v1080
        %v1580 = vmul.f32 %v1516, %v1082
        %v1581 = vmul.f32 %v1517, %v1084
        %v1582 = vmul.f32 %v1518, %v1086
        %v1583 = vmul.f32 %v1519, %v1088
        %v1584 = vmul.f32 %v1520, %v1090
        %v1585 = vmul.f32 %v1521, %v1092
        %v1586 = vmul.f32 %v1522, %v1094
        %v1587 = vmul.f32 %v1523, %v1096
        %v1588 = vmul.f32 %v1524, %v1098
        %v1589 = vmul.f32 %v1525, %v1100
        %v1590 = vmul.f32 %v1526, %v1102
        %v1591 = vmul.f32 %v1527, %v1104
        %v1592 = vmul.f32 %v1528, %v1106
        %v1593 = vmul.f32 %v1529, %v1108
        %v1594 = vmul.f32 %v1530, %v1110
        %v1595 = vmul.f32 %v1531, %v1112
        %v1596 = vmul.f32 %v1532, %v1114
        %v1597 = vmul.f32 %v1533, %v1116
        %v1598 = vmul.f32 %v1534, %v1118
        %v1599 = vmul.f32 %v1535, %v1120
        %v1600 = vmul.f32 %v1536, %v1122
        %v1601 = vmul.f32 %v1537, %v1124
        %v1602 = vmul.f32 %v1538, %v1126
        %v1603 = vmul.f32 %v1539, %v1128
        %v1604 = vmul.f32 %v1540, %v1130
        %v1605 = vmul.f32 %v1541, %v1132
        %v1606 = vmul.f32 %v1542, %v1134
        %v1607 = vmul.f32 %v1543, %v1136
        %v1608 = vmul.f32 %v1544, %v1138
        %v1609 = vmul.f32 %v1545, %v1140
        %v1610 = vmul.f32 %v1546, %v1142
        %v1611 = vmul.f32 %v1547, %v1144
        %v1612 = vmul.f32 %v1548, %v1146
        %v1613 = vmul.f32 %v1549, %v1148
        %v1614 = vmul.f32 %v1550, %v1150
        %v1615 = vmul.f32 %v1551, %v1152
        %v1616 = vmul.f32 %v1552, %v1154
        %v1617 = vmul.f32 %v1553, %v1156
        %v1618 = vmul.f32 %v1554, %v1158
        %v1619 = vmul.f32 %v1555, %v1160
        %v1620 = vmul.f32 %v1556, %v1162
        %v1621 = vmul.f32 %v1557, %v1164
        %v1622 = vmul.f32 %v1558, %v1166
        %v1623 = vmul.f32 %v1559, %v1168
        %v1624 = vmul.f32 %v1560, %v1170
        %v1625 = vmul.f32 %v1561, %v1172
        %v1626 = vmul.f32 %v1562, %v1174
        %v1627 = vmul.f32 %v1563, %v1176
        %v1628 = vmul.f32 %v1564, %v1178
        %v1629 = vmul.f32 %v1565, %v1180
        %v1630 = vmul.f32 %v1566, %v1182
        %v1631 = vadd.f32 %v1567, 0.2548296
        %v1632 = vadd.f32 %v1568, 0.2548296
        %v1633 = vadd.f32 %v1569, 0.2548296
        %v1634 = vadd.f32 %v1570, 0.2548296
        %v1635 = vadd.f32 %v1571, 0.2548296
        %v1636 = vadd.f32 %v1572, 0.2548296
        %v1637 = vadd.f32 %v1573, 0.2548296
        %v1638 = vadd.f32 %v1574, 0.2548296
        %v1639 = vadd.f32 %v1575, 0.2548296
        %v1640 = vadd.f32 %v1576, 0.2548296
        %v1641 = vadd.f32 %v1577, 0.2548296
        %v1642 = vadd.f32 %v1578, 0.2548296
        %v1643 = vadd.f32 %v1579, 0.2548296
        %v1644 = vadd.f32 %v1580, 0.2548296
        %v1645 = vadd.f32 %v1581, 0.2548296
        %v1646 = vadd.f32 %v1582, 0.2548296
        %v1647 = vadd.f32 %v1583, 0.2548296
        %v1648 = vadd.f32 %v1584, 0.2548296
        %v1649 = vadd.f32 %v1585, 0.2548296
        %v1650 = vadd.f32 %v1586, 0.2548296
        %v1651 = vadd.f32 %v1587, 0.2548296
        %v1652 = vadd.f32 %v1588, 0.2548296
        %v1653 = vadd.f32 %v1589, 0.2548296
        %v1654 = vadd.f32 %v1590, 0.2548296
        %v1655 = vadd.f32 %v1591, 0.2548296
        %v1656 = vadd.f32 %v1592, 0.2548296
        %v1657 = vadd.f32 %v1593, 0.2548296
        %v1658 = vadd.f32 %v1594, 0.2548296
        %v1659 = vadd.f32 %v1595, 0.2548296
        %v1660 = vadd.f32 %v1596, 0.2548296
        %v1661 = vadd.f32 %v1597, 0.2548296
        %v1662 = vadd.f32 %v1598, 0.2548296
        %v1663 = vadd.f32 %v1599, 0.2548296
        %v1664 = vadd.f32 %v1600, 0.2548296
        %v1665 = vadd.f32 %v1601, 0.2548296
        %v1666 = vadd.f32 %v1602, 0.2548296
        %v1667 = vadd.f32 %v1603, 0.2548296
        %v1668 = vadd.f32 %v1604, 0.2548296
        %v1669 = vadd.f32 %v1605, 0.2548296
        %v1670 = vadd.f32 %v1606, 0.2548296
        %v1671 = vadd.f32 %v1607, 0.2548296
        %v1672 = vadd.f32 %v1608, 0.2548296
        %v1673 = vadd.f32 %v1609, 0.2548296
        %v1674 = vadd.f32 %v1610, 0.2548296
        %v1675 = vadd.f32 %v1611, 0.2548296
        %v1676 = vadd.f32 %v1612, 0.2548296
        %v1677 = vadd.f32 %v1613, 0.2548296
        %v1678 = vadd.f32 %v1614, 0.2548296
        %v1679 = vadd.f32 %v1615, 0.2548296
        %v1680 = vadd.f32 %v1616, 0.2548296
        %v1681 = vadd.f32 %v1617, 0.2548296
        %v1682 = vadd.f32 %v1618, 0.2548296
        %v1683 = vadd.f32 %v1619, 0.2548296
        %v1684 = vadd.f32 %v1620, 0.2548296
        %v1685 = vadd.f32 %v1621, 0.2548296
        %v1686 = vadd.f32 %v1622, 0.2548296
        %v1687 = vadd.f32 %v1623, 0.2548296
        %v1688 = vadd.f32 %v1624, 0.2548296
        %v1689 = vadd.f32 %v1625, 0.2548296
        %v1690 = vadd.f32 %v1626, 0.2548296
        %v1691 = vadd.f32 %v1627, 0.2548296
        %v1692 = vadd.f32 %v1628, 0.2548296
        %v1693 = vadd.f32 %v1629, 0.2548296
        %v1694 = vadd.f32 %v1630, 0.2548296
        %v1695 = vmul.f32 %v1631, %v1056
        %v1696 = vmul.f32 %v1632, %v1058
        %v1697 = vmul.f32 %v1633, %v1060
        %v1698 = vmul.f32 %v1634, %v1062
        %v1699 = vmul.f32 %v1635, %v1064
        %v1700 = vmul.f32 %v1636, %v1066
        %v1701 = vmul.f32 %v1637, %v1068
        %v1702 = vmul.f32 %v1638, %v1070
        %v1703 = vmul.f32 %v1639, %v1072
        %v1704 = vmul.f32 %v1640, %v1074
        %v1705 = vmul.f32 %v1641, %v1076
        %v1706 = vmul.f32 %v1642, %v1078
        %v1707 = vmul.f32 %v1643, %v1080
        %v1708 = vmul.f32 %v1644, %v1082
        %v1709 = vmul.f32 %v1645, %v1084
        %v1710 = vmul.f32 %v1646, %v1086
        %v1711 = vmul.f32 %v1647, %v1088
        %v1712 = vmul.f32 %v1648, %v1090
        %v1713 = vmul.f32 %v1649, %v1092
        %v1714 = vmul.f32 %v1650, %v1094
        %v1715 = vmul.f32 %v1651, %v1096
        %v1716 = vmul.f32 %v1652, %v1098
        %v1717 = vmul.f32 %v1653, %v1100
        %v1718 = vmul.f32 %v1654, %v1102
        %v1719 = vmul.f32 %v1655, %v1104
        %v1720 = vmul.f32 %v1656, %v1106
        %v1721 = vmul.f32 %v1657, %v1108
        %v1722 = vmul.f32 %v1658, %v1110
        %v1723 = vmul.f32 %v1659, %v1112
        %v1724 = vmul.f32 %v1660, %v1114
        %v1725 = vmul.f32 %v1661, %v1116
        %v1726 = vmul.f32 %v1662, %v1118
        %v1727 = vmul.f32 %v1663, %v1120
        %v1728 = vmul.f32 %v1664, %v1122
        %v1729 = vmul.f32 %v1665, %v1124
        %v1730 = vmul.f32 %v1666, %v1126
        %v1731 = vmul.f32 %v1667, %v1128
        %v1732 = vmul.f32 %v1668, %v1130
        %v1733 = vmul.f32 %v1669, %v1132
        %v1734 = vmul.f32 %v1670, %v1134
        %v1735 = vmul.f32 %v1671, %v1136
        %v1736 = vmul.f32 %v1672, %v1138
        %v1737 = vmul.f32 %v1673, %v1140
        %v1738 = vmul.f32 %v1674, %v1142
        %v1739 = vmul.f32 %v1675, %v1144
        %v1740 = vmul.f32 %v1676, %v1146
        %v1741 = vmul.f32 %v1677, %v1148
        %v1742 = vmul.f32 %v1678, %v1150
        %v1743 = vmul.f32 %v1679, %v1152
        %v1744 = vmul.f32 %v1680, %v1154
        %v1745 = vmul.f32 %v1681, %v1156
        %v1746 = vmul.f32 %v1682, %v1158
        %v1747 = vmul.f32 %v1683, %v1160
        %v1748 = vmul.f32 %v1684, %v1162
        %v1749 = vmul.f32 %v1685, %v1164
        %v1750 = vmul.f32 %v1686, %v1166
        %v1751 = vmul.f32 %v1687, %v1168
        %v1752 = vmul.f32 %v1688, %v1170
        %v1753 = vmul.f32 %v1689, %v1172
        %v1754 = vmul.f32 %v1690, %v1174
        %v1755 = vmul.f32 %v1691, %v1176
        %v1756 = vmul.f32 %v1692, %v1178
        %v1757 = vmul.f32 %v1693, %v1180
        %v1758 = vmul.f32 %v1694, %v1182
        %v1759 = vsub.f32 0.0, %v863
        %v1760 = vsub.f32 0.0, %v864
        %v1761 = vsub.f32 0.0, %v865
        %v1762 = vsub.f32 0.0, %v866
        %v1763 = vsub.f32 0.0, %v867
        %v1764 = vsub.f32 0.0, %v868
        %v1765 = vsub.f32 0.0, %v869
        %v1766 = vsub.f32 0.0, %v870
        %v1767 = vsub.f32 0.0, %v871
        %v1768 = vsub.f32 0.0, %v872
        %v1769 = vsub.f32 0.0, %v873
        %v1770 = vsub.f32 0.0, %v874
        %v1771 = vsub.f32 0.0, %v875
        %v1772 = vsub.f32 0.0, %v876
        %v1773 = vsub.f32 0.0, %v877
        %v1774 = vsub.f32 0.0, %v878
        %v1775 = vsub.f32 0.0, %v879
        %v1776 = vsub.f32 0.0, %v880
        %v1777 = vsub.f32 0.0, %v881
        %v1778 = vsub.f32 0.0, %v882
        %v1779 = vsub.f32 0.0, %v883
        %v1780 = vsub.f32 0.0, %v884
        %v1781 = vsub.f32 0.0, %v885
        %v1782 = vsub.f32 0.0, %v886
        %v1783 = vsub.f32 0.0, %v887
        %v1784 = vsub.f32 0.0, %v888
        %v1785 = vsub.f32 0.0, %v889
        %v1786 = vsub.f32 0.0, %v890
        %v1787 = vsub.f32 0.0, %v891
        %v1788 = vsub.f32 0.0, %v892
        %v1789 = vsub.f32 0.0, %v893
        %v1790 = vsub.f32 0.0, %v894
        %v1791 = vsub.f32 0.0, %v895
        %v1792 = vsub.f32 0.0, %v896
        %v1793 = vsub.f32 0.0, %v897
        %v1794 = vsub.f32 0.0, %v898
        %v1795 = vsub.f32 0.0, %v899
        %v1796 = vsub.f32 0.0, %v900
        %v1797 = vsub.f32 0.0, %v901
        %v1798 = vsub.f32 0.0, %v902
        %v1799 = vsub.f32 0.0, %v903
        %v1800 = vsub.f32 0.0, %v904
        %v1801 = vsub.f32 0.0, %v905
        %v1802 = vsub.f32 0.0, %v906
        %v1803 = vsub.f32 0.0, %v907
        %v1804 = vsub.f32 0.0, %v908
        %v1805 = vsub.f32 0.0, %v909
        %v1806 = vsub.f32 0.0, %v910
        %v1807 = vsub.f32 0.0, %v911
        %v1808 = vsub.f32 0.0, %v912
        %v1809 = vsub.f32 0.0, %v913
        %v1810 = vsub.f32 0.0, %v914
        %v1811 = vsub.f32 0.0, %v915
        %v1812 = vsub.f32 0.0, %v916
        %v1813 = vsub.f32 0.0, %v917
        %v1814 = vsub.f32 0.0, %v918
        %v1815 = vsub.f32 0.0, %v919
        %v1816 = vsub.f32 0.0, %v920
        %v1817 = vsub.f32 0.0, %v921
        %v1818 = vsub.f32 0.0, %v922
        %v1819 = vsub.f32 0.0, %v923
        %v1820 = vsub.f32 0.0, %v924
        %v1821 = vsub.f32 0.0, %v925
        %v1822 = vsub.f32 0.0, %v926
        %v1823 = vmul.f32 %v1759, %v863
        %v1824 = vmul.f32 %v1760, %v864
        %v1825 = vmul.f32 %v1761, %v865
        %v1826 = vmul.f32 %v1762, %v866
        %v1827 = vmul.f32 %v1763, %v867
        %v1828 = vmul.f32 %v1764, %v868
        %v1829 = vmul.f32 %v1765, %v869
        %v1830 = vmul.f32 %v1766, %v870
        %v1831 = vmul.f32 %v1767, %v871
        %v1832 = vmul.f32 %v1768, %v872
        %v1833 = vmul.f32 %v1769, %v873
        %v1834 = vmul.f32 %v1770, %v874
        %v1835 = vmul.f32 %v1771, %v875
        %v1836 = vmul.f32 %v1772, %v876
        %v1837 = vmul.f32 %v1773, %v877
        %v1838 = vmul.f32 %v1774, %v878
        %v1839 = vmul.f32 %v1775, %v879
        %v1840 = vmul.f32 %v1776, %v880
        %v1841 = vmul.f32 %v1777, %v881
        %v1842 = vmul.f32 %v1778, %v882
        %v1843 = vmul.f32 %v1779, %v883
        %v1844 = vmul.f32 %v1780, %v884
        %v1845 = vmul.f32 %v1781, %v885
        %v1846 = vmul.f32 %v1782, %v886
        %v1847 = vmul.f32 %v1783, %v887
        %v1848 = vmul.f32 %v1784, %v888
        %v1849 = vmul.f32 %v1785, %v889
        %v1850 = vmul.f32 %v1786, %v890
        %v1851 = vmul.f32 %v1787, %v891
        %v1852 = vmul.f32 %v1788, %v892
        %v1853 = vmul.f32 %v1789, %v893
        %v1854 = vmul.f32 %v1790, %v894
        %v1855 = vmul.f32 %v1791, %v895
        %v1856 = vmul.f32 %v1792, %v896
        %v1857 = vmul.f32 %v1793, %v897
        %v1858 = vmul.f32 %v1794, %v898
        %v1859 = vmul.f32 %v1795, %v899
        %v1860 = vmul.f32 %v1796, %v900
        %v1861 = vmul.f32 %v1797, %v901
        %v1862 = vmul.f32 %v1798, %v902
        %v1863 = vmul.f32 %v1799, %v903
        %v1864 = vmul.f32 %v1800, %v904
        %v1865 = vmul.f32 %v1801, %v905
        %v1866 = vmul.f32 %v1802, %v906
        %v1867 = vmul.f32 %v1803, %v907
        %v1868 = vmul.f32 %v1804, %v908
        %v1869 = vmul.f32 %v1805, %v909
        %v1870 = vmul.f32 %v1806, %v910
        %v1871 = vmul.f32 %v1807, %v911
        %v1872 = vmul.f32 %v1808, %v912
        %v1873 = vmul.f32 %v1809, %v913
        %v1874 = vmul.f32 %v1810, %v914
        %v1875 = vmul.f32 %v1811, %v915
        %v1876 = vmul.f32 %v1812, %v916
        %v1877 = vmul.f32 %v1813, %v917
        %v1878 = vmul.f32 %v1814, %v918
        %v1879 = vmul.f32 %v1815, %v919
        %v1880 = vmul.f32 %v1816, %v920
        %v1881 = vmul.f32 %v1817, %v921
        %v1882 = vmul.f32 %v1818, %v922
        %v1883 = vmul.f32 %v1819, %v923
        %v1884 = vmul.f32 %v1820, %v924
        %v1885 = vmul.f32 %v1821, %v925
        %v1886 = vmul.f32 %v1822, %v926
        %v1887 = vmul.f32 %v1823, 1.442695
        %v1888 = vpow.pop %v1887
        %v1889 = vmul.f32 %v1824, 1.442695
        %v1890 = vpow.pop %v1889
        %v1891 = vmul.f32 %v1825, 1.442695
        %v1892 = vpow.pop %v1891
        %v1893 = vmul.f32 %v1826, 1.442695
        %v1894 = vpow.pop %v1893
        %v1895 = vmul.f32 %v1827, 1.442695
        %v1896 = vpow.pop %v1895
        %v1897 = vmul.f32 %v1828, 1.442695
        %v1898 = vpow.pop %v1897
        %v1899 = vmul.f32 %v1829, 1.442695
        %v1900 = vpow.pop %v1899
        %v1901 = vmul.f32 %v1830, 1.442695
        %v1902 = vpow.pop %v1901
        %v1903 = vmul.f32 %v1831, 1.442695
        %v1904 = vpow.pop %v1903
        %v1905 = vmul.f32 %v1832, 1.442695
        %v1906 = vpow.pop %v1905
        %v1907 = vmul.f32 %v1833, 1.442695
        %v1908 = vpow.pop %v1907
        %v1909 = vmul.f32 %v1834, 1.442695
        %v1910 = vpow.pop %v1909
        %v1911 = vmul.f32 %v1835, 1.442695
        %v1912 = vpow.pop %v1911
        %v1913 = vmul.f32 %v1836, 1.442695
        %v1914 = vpow.pop %v1913
        %v1915 = vmul.f32 %v1837, 1.442695
        %v1916 = vpow.pop %v1915
        %v1917 = vmul.f32 %v1838, 1.442695
        %v1918 = vpow.pop %v1917
        %v1919 = vmul.f32 %v1839, 1.442695
        %v1920 = vpow.pop %v1919
        %v1921 = vmul.f32 %v1840, 1.442695
        %v1922 = vpow.pop %v1921
        %v1923 = vmul.f32 %v1841, 1.442695
        %v1924 = vpow.pop %v1923
        %v1925 = vmul.f32 %v1842, 1.442695
        %v1926 = vpow.pop %v1925
        %v1927 = vmul.f32 %v1843, 1.442695
        %v1928 = vpow.pop %v1927
        %v1929 = vmul.f32 %v1844, 1.442695
        %v1930 = vpow.pop %v1929
        %v1931 = vmul.f32 %v1845, 1.442695
        %v1932 = vpow.pop %v1931
        %v1933 = vmul.f32 %v1846, 1.442695
        %v1934 = vpow.pop %v1933
        %v1935 = vmul.f32 %v1847, 1.442695
        %v1936 = vpow.pop %v1935
        %v1937 = vmul.f32 %v1848, 1.442695
        %v1938 = vpow.pop %v1937
        %v1939 = vmul.f32 %v1849, 1.442695
        %v1940 = vpow.pop %v1939
        %v1941 = vmul.f32 %v1850, 1.442695
        %v1942 = vpow.pop %v1941
        %v1943 = vmul.f32 %v1851, 1.442695
        %v1944 = vpow.pop %v1943
        %v1945 = vmul.f32 %v1852, 1.442695
        %v1946 = vpow.pop %v1945
        %v1947 = vmul.f32 %v1853, 1.442695
        %v1948 = vpow.pop %v1947
        %v1949 = vmul.f32 %v1854, 1.442695
        %v1950 = vpow.pop %v1949
        %v1951 = vmul.f32 %v1855, 1.442695
        %v1952 = vpow.pop %v1951
        %v1953 = vmul.f32 %v1856, 1.442695
        %v1954 = vpow.pop %v1953
        %v1955 = vmul.f32 %v1857, 1.442695
        %v1956 = vpow.pop %v1955
        %v1957 = vmul.f32 %v1858, 1.442695
        %v1958 = vpow.pop %v1957
        %v1959 = vmul.f32 %v1859, 1.442695
        %v1960 = vpow.pop %v1959
        %v1961 = vmul.f32 %v1860, 1.442695
        %v1962 = vpow.pop %v1961
        %v1963 = vmul.f32 %v1861, 1.442695
        %v1964 = vpow.pop %v1963
        %v1965 = vmul.f32 %v1862, 1.442695
        %v1966 = vpow.pop %v1965
        %v1967 = vmul.f32 %v1863, 1.442695
        %v1968 = vpow.pop %v1967
        %v1969 = vmul.f32 %v1864, 1.442695
        %v1970 = vpow.pop %v1969
        %v1971 = vmul.f32 %v1865, 1.442695
        %v1972 = vpow.pop %v1971
        %v1973 = vmul.f32 %v1866, 1.442695
        %v1974 = vpow.pop %v1973
        %v1975 = vmul.f32 %v1867, 1.442695
        %v1976 = vpow.pop %v1975
        %v1977 = vmul.f32 %v1868, 1.442695
        %v1978 = vpow.pop %v1977
        %v1979 = vmul.f32 %v1869, 1.442695
        %v1980 = vpow.pop %v1979
        %v1981 = vmul.f32 %v1870, 1.442695
        %v1982 = vpow.pop %v1981
        %v1983 = vmul.f32 %v1871, 1.442695
        %v1984 = vpow.pop %v1983
        %v1985 = vmul.f32 %v1872, 1.442695
        %v1986 = vpow.pop %v1985
        %v1987 = vmul.f32 %v1873, 1.442695
        %v1988 = vpow.pop %v1987
        %v1989 = vmul.f32 %v1874, 1.442695
        %v1990 = vpow.pop %v1989
        %v1991 = vmul.f32 %v1875, 1.442695
        %v1992 = vpow.pop %v1991
        %v1993 = vmul.f32 %v1876, 1.442695
        %v1994 = vpow.pop %v1993
        %v1995 = vmul.f32 %v1877, 1.442695
        %v1996 = vpow.pop %v1995
        %v1997 = vmul.f32 %v1878, 1.442695
        %v1998 = vpow.pop %v1997
        %v1999 = vmul.f32 %v1879, 1.442695
        %v2000 = vpow.pop %v1999
        %v2001 = vmul.f32 %v1880, 1.442695
        %v2002 = vpow.pop %v2001
        %v2003 = vmul.f32 %v1881, 1.442695
        %v2004 = vpow.pop %v2003
        %v2005 = vmul.f32 %v1882, 1.442695
        %v2006 = vpow.pop %v2005
        %v2007 = vmul.f32 %v1883, 1.442695
        %v2008 = vpow.pop %v2007
        %v2009 = vmul.f32 %v1884, 1.442695
        %v2010 = vpow.pop %v2009
        %v2011 = vmul.f32 %v1885, 1.442695
        %v2012 = vpow.pop %v2011
        %v2013 = vmul.f32 %v1886, 1.442695
        %v2014 = vpow.pop %v2013
        %v2015 = vmul.f32 %v1695, %v1888
        %v2016 = vmul.f32 %v1696, %v1890
        %v2017 = vmul.f32 %v1697, %v1892
        %v2018 = vmul.f32 %v1698, %v1894
        %v2019 = vmul.f32 %v1699, %v1896
        %v2020 = vmul.f32 %v1700, %v1898
        %v2021 = vmul.f32 %v1701, %v1900
        %v2022 = vmul.f32 %v1702, %v1902
        %v2023 = vmul.f32 %v1703, %v1904
        %v2024 = vmul.f32 %v1704, %v1906
        %v2025 = vmul.f32 %v1705, %v1908
        %v2026 = vmul.f32 %v1706, %v1910
        %v2027 = vmul.f32 %v1707, %v1912
        %v2028 = vmul.f32 %v1708, %v1914
        %v2029 = vmul.f32 %v1709, %v1916
        %v2030 = vmul.f32 %v1710, %v1918
        %v2031 = vmul.f32 %v1711, %v1920
        %v2032 = vmul.f32 %v1712, %v1922
        %v2033 = vmul.f32 %v1713, %v1924
        %v2034 = vmul.f32 %v1714, %v1926
        %v2035 = vmul.f32 %v1715, %v1928
        %v2036 = vmul.f32 %v1716, %v1930
        %v2037 = vmul.f32 %v1717, %v1932
        %v2038 = vmul.f32 %v1718, %v1934
        %v2039 = vmul.f32 %v1719, %v1936
        %v2040 = vmul.f32 %v1720, %v1938
        %v2041 = vmul.f32 %v1721, %v1940
        %v2042 = vmul.f32 %v1722, %v1942
        %v2043 = vmul.f32 %v1723, %v1944
        %v2044 = vmul.f32 %v1724, %v1946
        %v2045 = vmul.f32 %v1725, %v1948
        %v2046 = vmul.f32 %v1726, %v1950
        %v2047 = vmul.f32 %v1727, %v1952
        %v2048 = vmul.f32 %v1728, %v1954
        %v2049 = vmul.f32 %v1729, %v1956
        %v2050 = vmul.f32 %v1730, %v1958
        %v2051 = vmul.f32 %v1731, %v1960
        %v2052 = vmul.f32 %v1732, %v1962
        %v2053 = vmul.f32 %v1733, %v1964
        %v2054 = vmul.f32 %v1734, %v1966
        %v2055 = vmul.f32 %v1735, %v1968
        %v2056 = vmul.f32 %v1736, %v1970
        %v2057 = vmul.f32 %v1737, %v1972
        %v2058 = vmul.f32 %v1738, %v1974
        %v2059 = vmul.f32 %v1739, %v1976
        %v2060 = vmul.f32 %v1740, %v1978
        %v2061 = vmul.f32 %v1741, %v1980
        %v2062 = vmul.f32 %v1742, %v1982
        %v2063 = vmul.f32 %v1743, %v1984
        %v2064 = vmul.f32 %v1744, %v1986
        %v2065 = vmul.f32 %v1745, %v1988
        %v2066 = vmul.f32 %v1746, %v1990
        %v2067 = vmul.f32 %v1747, %v1992
        %v2068 = vmul.f32 %v1748, %v1994
        %v2069 = vmul.f32 %v1749, %v1996
        %v2070 = vmul.f32 %v1750, %v1998
        %v2071 = vmul.f32 %v1751, %v2000
        %v2072 = vmul.f32 %v1752, %v2002
        %v2073 = vmul.f32 %v1753, %v2004
        %v2074 = vmul.f32 %v1754, %v2006
        %v2075 = vmul.f32 %v1755, %v2008
        %v2076 = vmul.f32 %v1756, %v2010
        %v2077 = vmul.f32 %v1757, %v2012
        %v2078 = vmul.f32 %v1758, %v2014
        %v2079 = vsub.f32 1.0, %v2015
        %v2080 = vsub.f32 1.0, %v2016
        %v2081 = vsub.f32 1.0, %v2017
        %v2082 = vsub.f32 1.0, %v2018
        %v2083 = vsub.f32 1.0, %v2019
        %v2084 = vsub.f32 1.0, %v2020
        %v2085 = vsub.f32 1.0, %v2021
        %v2086 = vsub.f32 1.0, %v2022
        %v2087 = vsub.f32 1.0, %v2023
        %v2088 = vsub.f32 1.0, %v2024
        %v2089 = vsub.f32 1.0, %v2025
        %v2090 = vsub.f32 1.0, %v2026
        %v2091 = vsub.f32 1.0, %v2027
        %v2092 = vsub.f32 1.0, %v2028
        %v2093 = vsub.f32 1.0, %v2029
        %v2094 = vsub.f32 1.0, %v2030
        %v2095 = vsub.f32 1.0, %v2031
        %v2096 = vsub.f32 1.0, %v2032
        %v2097 = vsub.f32 1.0, %v2033
        %v2098 = vsub.f32 1.0, %v2034
        %v2099 = vsub.f32 1.0, %v2035
        %v2100 = vsub.f32 1.0, %v2036
        %v2101 = vsub.f32 1.0, %v2037
        %v2102 = vsub.f32 1.0, %v2038
        %v2103 = vsub.f32 1.0, %v2039
        %v2104 = vsub.f32 1.0, %v2040
        %v2105 = vsub.f32 1.0, %v2041
        %v2106 = vsub.f32 1.0, %v2042
        %v2107 = vsub.f32 1.0, %v2043
        %v2108 = vsub.f32 1.0, %v2044
        %v2109 = vsub.f32 1.0, %v2045
        %v2110 = vsub.f32 1.0, %v2046
        %v2111 = vsub.f32 1.0, %v2047
        %v2112 = vsub.f32 1.0, %v2048
        %v2113 = vsub.f32 1.0, %v2049
        %v2114 = vsub.f32 1.0, %v2050
        %v2115 = vsub.f32 1.0, %v2051
        %v2116 = vsub.f32 1.0, %v2052
        %v2117 = vsub.f32 1.0, %v2053
        %v2118 = vsub.f32 1.0, %v2054
        %v2119 = vsub.f32 1.0, %v2055
        %v2120 = vsub.f32 1.0, %v2056
        %v2121 = vsub.f32 1.0, %v2057
        %v2122 = vsub.f32 1.0, %v2058
        %v2123 = vsub.f32 1.0, %v2059
        %v2124 = vsub.f32 1.0, %v2060
        %v2125 = vsub.f32 1.0, %v2061
        %v2126 = vsub.f32 1.0, %v2062
        %v2127 = vsub.f32 1.0, %v2063
        %v2128 = vsub.f32 1.0, %v2064
        %v2129 = vsub.f32 1.0, %v2065
        %v2130 = vsub.f32 1.0, %v2066
        %v2131 = vsub.f32 1.0, %v2067
        %v2132 = vsub.f32 1.0, %v2068
        %v2133 = vsub.f32 1.0, %v2069
        %v2134 = vsub.f32 1.0, %v2070
        %v2135 = vsub.f32 1.0, %v2071
        %v2136 = vsub.f32 1.0, %v2072
        %v2137 = vsub.f32 1.0, %v2073
        %v2138 = vsub.f32 1.0, %v2074
        %v2139 = vsub.f32 1.0, %v2075
        %v2140 = vsub.f32 1.0, %v2076
        %v2141 = vsub.f32 1.0, %v2077
        %v2142 = vsub.f32 1.0, %v2078
        %v2143 = vmul.f32 %v799, %v2079
        %v2144 = vmul.f32 %v800, %v2080
        %v2145 = vmul.f32 %v801, %v2081
        %v2146 = vmul.f32 %v802, %v2082
        %v2147 = vmul.f32 %v803, %v2083
        %v2148 = vmul.f32 %v804, %v2084
        %v2149 = vmul.f32 %v805, %v2085
        %v2150 = vmul.f32 %v806, %v2086
        %v2151 = vmul.f32 %v807, %v2087
        %v2152 = vmul.f32 %v808, %v2088
        %v2153 = vmul.f32 %v809, %v2089
        %v2154 = vmul.f32 %v810, %v2090
        %v2155 = vmul.f32 %v811, %v2091
        %v2156 = vmul.f32 %v812, %v2092
        %v2157 = vmul.f32 %v813, %v2093
        %v2158 = vmul.f32 %v814, %v2094
        %v2159 = vmul.f32 %v815, %v2095
        %v2160 = vmul.f32 %v816, %v2096
        %v2161 = vmul.f32 %v817, %v2097
        %v2162 = vmul.f32 %v818, %v2098
        %v2163 = vmul.f32 %v819, %v2099
        %v2164 = vmul.f32 %v820, %v2100
        %v2165 = vmul.f32 %v821, %v2101
        %v2166 = vmul.f32 %v822, %v2102
        %v2167 = vmul.f32 %v823, %v2103
        %v2168 = vmul.f32 %v824, %v2104
        %v2169 = vmul.f32 %v825, %v2105
        %v2170 = vmul.f32 %v826, %v2106
        %v2171 = vmul.f32 %v827, %v2107
        %v2172 = vmul.f32 %v828, %v2108
        %v2173 = vmul.f32 %v829, %v2109
        %v2174 = vmul.f32 %v830, %v2110
        %v2175 = vmul.f32 %v831, %v2111
        %v2176 = vmul.f32 %v832, %v2112
        %v2177 = vmul.f32 %v833, %v2113
        %v2178 = vmul.f32 %v834, %v2114
        %v2179 = vmul.f32 %v835, %v2115
        %v2180 = vmul.f32 %v836, %v2116
        %v2181 = vmul.f32 %v837, %v2117
        %v2182 = vmul.f32 %v838, %v2118
        %v2183 = vmul.f32 %v839, %v2119
        %v2184 = vmul.f32 %v840, %v2120
        %v2185 = vmul.f32 %v841, %v2121
        %v2186 = vmul.f32 %v842, %v2122
        %v2187 = vmul.f32 %v843, %v2123
        %v2188 = vmul.f32 %v844, %v2124
        %v2189 = vmul.f32 %v845, %v2125
        %v2190 = vmul.f32 %v846, %v2126
        %v2191 = vmul.f32 %v847, %v2127
        %v2192 = vmul.f32 %v848, %v2128
        %v2193 = vmul.f32 %v849, %v2129
        %v2194 = vmul.f32 %v850, %v2130
        %v2195 = vmul.f32 %v851, %v2131
        %v2196 = vmul.f32 %v852, %v2132
        %v2197 = vmul.f32 %v853, %v2133
        %v2198 = vmul.f32 %v854, %v2134
        %v2199 = vmul.f32 %v855, %v2135
        %v2200 = vmul.f32 %v856, %v2136
        %v2201 = vmul.f32 %v857, %v2137
        %v2202 = vmul.f32 %v858, %v2138
        %v2203 = vmul.f32 %v859, %v2139
        %v2204 = vmul.f32 %v860, %v2140
        %v2205 = vmul.f32 %v861, %v2141
        %v2206 = vmul.f32 %v862, %v2142
        %v2207 = vadd.f32 %v2143, 1.0
        %v2208 = vadd.f32 %v2144, 1.0
        %v2209 = vadd.f32 %v2145, 1.0
        %v2210 = vadd.f32 %v2146, 1.0
        %v2211 = vadd.f32 %v2147, 1.0
        %v2212 = vadd.f32 %v2148, 1.0
        %v2213 = vadd.f32 %v2149, 1.0
        %v2214 = vadd.f32 %v2150, 1.0
        %v2215 = vadd.f32 %v2151, 1.0
        %v2216 = vadd.f32 %v2152, 1.0
        %v2217 = vadd.f32 %v2153, 1.0
        %v2218 = vadd.f32 %v2154, 1.0
        %v2219 = vadd.f32 %v2155, 1.0
        %v2220 = vadd.f32 %v2156, 1.0
        %v2221 = vadd.f32 %v2157, 1.0
        %v2222 = vadd.f32 %v2158, 1.0
        %v2223 = vadd.f32 %v2159, 1.0
        %v2224 = vadd.f32 %v2160, 1.0
        %v2225 = vadd.f32 %v2161, 1.0
        %v2226 = vadd.f32 %v2162, 1.0
        %v2227 = vadd.f32 %v2163, 1.0
        %v2228 = vadd.f32 %v2164, 1.0
        %v2229 = vadd.f32 %v2165, 1.0
        %v2230 = vadd.f32 %v2166, 1.0
        %v2231 = vadd.f32 %v2167, 1.0
        %v2232 = vadd.f32 %v2168, 1.0
        %v2233 = vadd.f32 %v2169, 1.0
        %v2234 = vadd.f32 %v2170, 1.0
        %v2235 = vadd.f32 %v2171, 1.0
        %v2236 = vadd.f32 %v2172, 1.0
        %v2237 = vadd.f32 %v2173, 1.0
        %v2238 = vadd.f32 %v2174, 1.0
        %v2239 = vadd.f32 %v2175, 1.0
        %v2240 = vadd.f32 %v2176, 1.0
        %v2241 = vadd.f32 %v2177, 1.0
        %v2242 = vadd.f32 %v2178, 1.0
        %v2243 = vadd.f32 %v2179, 1.0
        %v2244 = vadd.f32 %v2180, 1.0
        %v2245 = vadd.f32 %v2181, 1.0
        %v2246 = vadd.f32 %v2182, 1.0
        %v2247 = vadd.f32 %v2183, 1.0
        %v2248 = vadd.f32 %v2184, 1.0
        %v2249 = vadd.f32 %v2185, 1.0
        %v2250 = vadd.f32 %v2186, 1.0
        %v2251 = vadd.f32 %v2187, 1.0
        %v2252 = vadd.f32 %v2188, 1.0
        %v2253 = vadd.f32 %v2189, 1.0
        %v2254 = vadd.f32 %v2190, 1.0
        %v2255 = vadd.f32 %v2191, 1.0
        %v2256 = vadd.f32 %v2192, 1.0
        %v2257 = vadd.f32 %v2193, 1.0
        %v2258 = vadd.f32 %v2194, 1.0
        %v2259 = vadd.f32 %v2195, 1.0
        %v2260 = vadd.f32 %v2196, 1.0
        %v2261 = vadd.f32 %v2197, 1.0
        %v2262 = vadd.f32 %v2198, 1.0
        %v2263 = vadd.f32 %v2199, 1.0
        %v2264 = vadd.f32 %v2200, 1.0
        %v2265 = vadd.f32 %v2201, 1.0
        %v2266 = vadd.f32 %v2202, 1.0
        %v2267 = vadd.f32 %v2203, 1.0
        %v2268 = vadd.f32 %v2204, 1.0
        %v2269 = vadd.f32 %v2205, 1.0
        %v2270 = vadd.f32 %v2206, 1.0
        %v2271 = vmul.f32 %v607, %v2207
        %v2272 = vmul.f32 %v608, %v2208
        %v2273 = vmul.f32 %v609, %v2209
        %v2274 = vmul.f32 %v610, %v2210
        %v2275 = vmul.f32 %v611, %v2211
        %v2276 = vmul.f32 %v612, %v2212
        %v2277 = vmul.f32 %v613, %v2213
        %v2278 = vmul.f32 %v614, %v2214
        %v2279 = vmul.f32 %v615, %v2215
        %v2280 = vmul.f32 %v616, %v2216
        %v2281 = vmul.f32 %v617, %v2217
        %v2282 = vmul.f32 %v618, %v2218
        %v2283 = vmul.f32 %v619, %v2219
        %v2284 = vmul.f32 %v620, %v2220
        %v2285 = vmul.f32 %v621, %v2221
        %v2286 = vmul.f32 %v622, %v2222
        %v2287 = vmul.f32 %v623, %v2223
        %v2288 = vmul.f32 %v624, %v2224
        %v2289 = vmul.f32 %v625, %v2225
        %v2290 = vmul.f32 %v626, %v2226
        %v2291 = vmul.f32 %v627, %v2227
        %v2292 = vmul.f32 %v628, %v2228
        %v2293 = vmul.f32 %v629, %v2229
        %v2294 = vmul.f32 %v630, %v2230
        %v2295 = vmul.f32 %v631, %v2231
        %v2296 = vmul.f32 %v632, %v2232
        %v2297 = vmul.f32 %v633, %v2233
        %v2298 = vmul.f32 %v634, %v2234
        %v2299 = vmul.f32 %v635, %v2235
        %v2300 = vmul.f32 %v636, %v2236
        %v2301 = vmul.f32 %v637, %v2237
        %v2302 = vmul.f32 %v638, %v2238
        %v2303 = vmul.f32 %v639, %v2239
        %v2304 = vmul.f32 %v640, %v2240
        %v2305 = vmul.f32 %v641, %v2241
        %v2306 = vmul.f32 %v642, %v2242
        %v2307 = vmul.f32 %v643, %v2243
        %v2308 = vmul.f32 %v644, %v2244
        %v2309 = vmul.f32 %v645, %v2245
        %v2310 = vmul.f32 %v646, %v2246
        %v2311 = vmul.f32 %v647, %v2247
        %v2312 = vmul.f32 %v648, %v2248
        %v2313 = vmul.f32 %v649, %v2249
        %v2314 = vmul.f32 %v650, %v2250
        %v2315 = vmul.f32 %v651, %v2251
        %v2316 = vmul.f32 %v652, %v2252
        %v2317 = vmul.f32 %v653, %v2253
        %v2318 = vmul.f32 %v654, %v2254
        %v2319 = vmul.f32 %v655, %v2255
        %v2320 = vmul.f32 %v656, %v2256
        %v2321 = vmul.f32 %v657, %v2257
        %v2322 = vmul.f32 %v658, %v2258
        %v2323 = vmul.f32 %v659, %v2259
        %v2324 = vmul.f32 %v660, %v2260
        %v2325 = vmul.f32 %v661, %v2261
        %v2326 = vmul.f32 %v662, %v2262
        %v2327 = vmul.f32 %v663, %v2263
        %v2328 = vmul.f32 %v664, %v2264
        %v2329 = vmul.f32 %v665, %v2265
        %v2330 = vmul.f32 %v666, %v2266
        %v2331 = vmul.f32 %v667, %v2267
        %v2332 = vmul.f32 %v668, %v2268
        %v2333 = vmul.f32 %v669, %v2269
        %v2334 = vmul.f32 %v670, %v2270
        %v2335 = vld [vmem:[#allocation7] sm:$0xff]
        %v2336 = vld [vmem:[#allocation7 + $0x8] sm:$0xff]
        %v2337 = vld [vmem:[#allocation7 + $0x10] sm:$0xff]
        %v2338 = vld [vmem:[#allocation7 + $0x18] sm:$0xff]
        %v2339 = vld [vmem:[#allocation7 + $0x20] sm:$0xff]
        %v2340 = vld [vmem:[#allocation7 + $0x28] sm:$0xff]
        %v2341 = vld [vmem:[#allocation7 + $0x30] sm:$0xff]
        %v2342 = vld [vmem:[#allocation7 + $0x38] sm:$0xff]
        %v2343 = vld [vmem:[#allocation7 + $0x40] sm:$0xff]
        %v2344 = vld [vmem:[#allocation7 + $0x48] sm:$0xff]
        %v2345 = vld [vmem:[#allocation7 + $0x50] sm:$0xff]
        %v2346 = vld [vmem:[#allocation7 + $0x58] sm:$0xff]
        %v2347 = vld [vmem:[#allocation7 + $0x60] sm:$0xff]
        %v2348 = vld [vmem:[#allocation7 + $0x68] sm:$0xff]
        %v2349 = vld [vmem:[#allocation7 + $0x70] sm:$0xff]
        %v2350 = vld [vmem:[#allocation7 + $0x78] sm:$0xff]
        %v2351 = vld [vmem:[#allocation7 + $0x80] sm:$0xff]
        %v2352 = vld [vmem:[#allocation7 + $0x88] sm:$0xff]
        %v2353 = vld [vmem:[#allocation7 + $0x90] sm:$0xff]
        %v2354 = vld [vmem:[#allocation7 + $0x98] sm:$0xff]
        %v2355 = vld [vmem:[#allocation7 + $0xa0] sm:$0xff]
        %v2356 = vld [vmem:[#allocation7 + $0xa8] sm:$0xff]
        %v2357 = vld [vmem:[#allocation7 + $0xb0] sm:$0xff]
        %v2358 = vld [vmem:[#allocation7 + $0xb8] sm:$0xff]
        %v2359 = vld [vmem:[#allocation7 + $0xc0] sm:$0xff]
        %v2360 = vld [vmem:[#allocation7 + $0xc8] sm:$0xff]
        %v2361 = vld [vmem:[#allocation7 + $0xd0] sm:$0xff]
        %v2362 = vld [vmem:[#allocation7 + $0xd8] sm:$0xff]
        %v2363 = vld [vmem:[#allocation7 + $0xe0] sm:$0xff]
        %v2364 = vld [vmem:[#allocation7 + $0xe8] sm:$0xff]
        %v2365 = vld [vmem:[#allocation7 + $0xf0] sm:$0xff]
        %v2366 = vld [vmem:[#allocation7 + $0xf8] sm:$0xff]
        %v2367 = vld [vmem:[%s4] sm:$0x1]
        %v2369 = vlaneseq
        %v2370 = vshrl.u32 %v2369, 7
        %v2371 = vsub.s32 0, %v2370
        %v2372 = vrot.slane %v2367, %v2371
        %2374 = vmatprep.subr.mxu0 0.0
        %2375 = vmatpush1.msra.mxu0 %v2335
        %2376 = vmatprep.subr.mxu0 0.0
        %2377 = vmatpush1.msra.mxu0 %v2336
        %2378 = vmatprep.subr.mxu0 0.0
        %2379 = vmatpush1.msra.mxu0 %v2337
        %2380 = vmatprep.subr.mxu0 0.0
        %2381 = vmatpush1.msra.mxu0 %v2338
        %2382 = vmatprep.subr.mxu0 0.0
        %2383 = vmatpush1.msra.mxu0 %v2339
        %2384 = vmatprep.subr.mxu0 0.0
        %2385 = vmatpush1.msra.mxu0 %v2340
        %2386 = vmatprep.subr.mxu0 0.0
        %2387 = vmatpush1.msra.mxu0 %v2341
        %2388 = vmatprep.subr.mxu0 0.0
        %2389 = vmatpush1.msra.mxu0 %v2342
        %2390 = vmatprep.subr.mxu0 0.0
        %2391 = vmatpush1.msra.mxu0 %v2343
        %2392 = vmatprep.subr.mxu0 0.0
        %2393 = vmatpush1.msra.mxu0 %v2344
        %2394 = vmatprep.subr.mxu0 0.0
        %2395 = vmatpush1.msra.mxu0 %v2345
        %2396 = vmatprep.subr.mxu0 0.0
        %2397 = vmatpush1.msra.mxu0 %v2346
        %2398 = vmatprep.subr.mxu0 0.0
        %2399 = vmatpush1.msra.mxu0 %v2347
        %2400 = vmatprep.subr.mxu0 0.0
        %2401 = vmatpush1.msra.mxu0 %v2348
        %2402 = vmatprep.subr.mxu0 0.0
        %2403 = vmatpush1.msra.mxu0 %v2349
        %2404 = vmatprep.subr.mxu0 0.0
        %2405 = vmatpush1.msra.mxu0 %v2350
        %2406 = vmatprep.subr.mxu0 0.0
        %2407 = vmatpush1.msra.mxu0 %v2351
        %2408 = vmatprep.subr.mxu0 0.0
        %2409 = vmatpush1.msra.mxu0 %v2352
        %2410 = vmatprep.subr.mxu0 0.0
        %2411 = vmatpush1.msra.mxu0 %v2353
        %2412 = vmatprep.subr.mxu0 0.0
        %2413 = vmatpush1.msra.mxu0 %v2354
        %2414 = vmatprep.subr.mxu0 0.0
        %2415 = vmatpush1.msra.mxu0 %v2355
        %2416 = vmatprep.subr.mxu0 0.0
        %2417 = vmatpush1.msra.mxu0 %v2356
        %2418 = vmatprep.subr.mxu0 0.0
        %2419 = vmatpush1.msra.mxu0 %v2357
        %2420 = vmatprep.subr.mxu0 0.0
        %2421 = vmatpush1.msra.mxu0 %v2358
        %2422 = vmatprep.subr.mxu0 0.0
        %2423 = vmatpush1.msra.mxu0 %v2359
        %2424 = vmatprep.subr.mxu0 0.0
        %2425 = vmatpush1.msra.mxu0 %v2360
        %2426 = vmatprep.subr.mxu0 0.0
        %2427 = vmatpush1.msra.mxu0 %v2361
        %2428 = vmatprep.subr.mxu0 0.0
        %2429 = vmatpush1.msra.mxu0 %v2362
        %2430 = vmatprep.subr.mxu0 0.0
        %2431 = vmatpush1.msra.mxu0 %v2363
        %2432 = vmatprep.subr.mxu0 0.0
        %2433 = vmatpush1.msra.mxu0 %v2364
        %2434 = vmatprep.subr.mxu0 0.0
        %2435 = vmatpush1.msra.mxu0 %v2365
        %2436 = vmatprep.subr.mxu0 0.0
        %2437 = vmatpush1.msra.mxu0 %v2366
        %2438 = vmatprep.mubr.f32.mxu0 %v2272
        %2439 = vmatmul.mubr.f32.gmra.mrb[0].mxu0 %v2271
        %v2440 = vpop.f32.mrb[0].mxu0
        %v2441 = vadd.f32 %v2372, %v2440
        %v2442 = vpop.f32.mrb[0].mxu0
        %2443 = vmatprep.mubr.f32.mxu0 %v2274
        %2444 = vmatmul.mubr.f32.gmra.mrb[0].mxu0 %v2273
        %v2445 = vpop.f32.mrb[0].mxu0
        %v2446 = vadd.f32 %v2372, %v2445
        %v2447 = vpop.f32.mrb[0].mxu0
        %2448 = vmatprep.mubr.f32.mxu0 %v2276
        %2449 = vmatmul.mubr.f32.gmra.mrb[0].mxu0 %v2275
        %v2450 = vpop.f32.mrb[0].mxu0
        %v2451 = vadd.f32 %v2372, %v2450
        %v2452 = vpop.f32.mrb[0].mxu0
        %2453 = vmatprep.mubr.f32.mxu0 %v2278
        %2454 = vmatmul.mubr.f32.gmra.mrb[0].mxu0 %v2277
        %v2455 = vpop.f32.mrb[0].mxu0
        %v2456 = vadd.f32 %v2372, %v2455
        %v2457 = vpop.f32.mrb[0].mxu0
        %2458 = vmatprep.mubr.f32.mxu0 %v2280
        %2459 = vmatmul.mubr.f32.gmra.mrb[0].mxu0 %v2279
        %v2460 = vpop.f32.mrb[0].mxu0
        %v2461 = vadd.f32 %v2372, %v2460
        %v2462 = vpop.f32.mrb[0].mxu0
        %2463 = vmatprep.mubr.f32.mxu0 %v2282
        %2464 = vmatmul.mubr.f32.gmra.mrb[0].mxu0 %v2281
        %v2465 = vpop.f32.mrb[0].mxu0
        %v2466 = vadd.f32 %v2372, %v2465
        %v2467 = vpop.f32.mrb[0].mxu0
        %2468 = vmatprep.mubr.f32.mxu0 %v2284
        %2469 = vmatmul.mubr.f32.gmra.mrb[0].mxu0 %v2283
        %v2470 = vpop.f32.mrb[0].mxu0
        %v2471 = vadd.f32 %v2372, %v2470
        %v2472 = vpop.f32.mrb[0].mxu0
        %2473 = vmatprep.mubr.f32.mxu0 %v2286
        %2474 = vmatmul.mubr.f32.gmra.mrb[0].mxu0 %v2285
        %v2475 = vpop.f32.mrb[0].mxu0
        %v2476 = vadd.f32 %v2372, %v2475
        %v2477 = vpop.f32.mrb[0].mxu0
        %2478 = vmatprep.mubr.f32.mxu0 %v2288
        %2479 = vmatmul.mubr.f32.gmra.mrb[0].mxu0 %v2287
        %v2480 = vpop.f32.mrb[0].mxu0
        %v2481 = vadd.f32 %v2372, %v2480
        %v2482 = vpop.f32.mrb[0].mxu0
        %2483 = vmatprep.mubr.f32.mxu0 %v2290
        %2484 = vmatmul.mubr.f32.gmra.mrb[0].mxu0 %v2289
        %v2485 = vpop.f32.mrb[0].mxu0
        %v2486 = vadd.f32 %v2372, %v2485
        %v2487 = vpop.f32.mrb[0].mxu0
        %2488 = vmatprep.mubr.f32.mxu0 %v2292
        %2489 = vmatmul.mubr.f32.gmra.mrb[0].mxu0 %v2291
        %v2490 = vpop.f32.mrb[0].mxu0
        %v2491 = vadd.f32 %v2372, %v2490
        %v2492 = vpop.f32.mrb[0].mxu0
        %2493 = vmatprep.mubr.f32.mxu0 %v2294
        %2494 = vmatmul.mubr.f32.gmra.mrb[0].mxu0 %v2293
        %v2495 = vpop.f32.mrb[0].mxu0
        %v2496 = vadd.f32 %v2372, %v2495
        %v2497 = vpop.f32.mrb[0].mxu0
        %2498 = vmatprep.mubr.f32.mxu0 %v2296
        %2499 = vmatmul.mubr.f32.gmra.mrb[0].mxu0 %v2295
        %v2500 = vpop.f32.mrb[0].mxu0
        %v2501 = vadd.f32 %v2372, %v2500
        %v2502 = vpop.f32.mrb[0].mxu0
        %2503 = vmatprep.mubr.f32.mxu0 %v2298
        %2504 = vmatmul.mubr.f32.gmra.mrb[0].mxu0 %v2297
        %v2505 = vpop.f32.mrb[0].mxu0
        %v2506 = vadd.f32 %v2372, %v2505
        %v2507 = vpop.f32.mrb[0].mxu0
        %2508 = vmatprep.mubr.f32.mxu0 %v2300
        %2509 = vmatmul.mubr.f32.gmra.mrb[0].mxu0 %v2299
        %v2510 = vpop.f32.mrb[0].mxu0
        %v2511 = vadd.f32 %v2372, %v2510
        %v2512 = vpop.f32.mrb[0].mxu0
        %2513 = vmatprep.mubr.f32.mxu0 %v2302
        %2514 = vmatmul.mubr.f32.gmra.mrb[0].mxu0 %v2301
        %v2515 = vpop.f32.mrb[0].mxu0
        %v2516 = vadd.f32 %v2372, %v2515
        %v2517 = vpop.f32.mrb[0].mxu0
        %2518 = vmatprep.mubr.f32.mxu0 %v2304
        %2519 = vmatmul.mubr.f32.gmra.mrb[0].mxu0 %v2303
        %v2520 = vpop.f32.mrb[0].mxu0
        %v2521 = vadd.f32 %v2372, %v2520
        %v2522 = vpop.f32.mrb[0].mxu0
        %2523 = vmatprep.mubr.f32.mxu0 %v2306
        %2524 = vmatmul.mubr.f32.gmra.mrb[0].mxu0 %v2305
        %v2525 = vpop.f32.mrb[0].mxu0
        %v2526 = vadd.f32 %v2372, %v2525
        %v2527 = vpop.f32.mrb[0].mxu0
        %2528 = vmatprep.mubr.f32.mxu0 %v2308
        %2529 = vmatmul.mubr.f32.gmra.mrb[0].mxu0 %v2307
        %v2530 = vpop.f32.mrb[0].mxu0
        %v2531 = vadd.f32 %v2372, %v2530
        %v2532 = vpop.f32.mrb[0].mxu0
        %2533 = vmatprep.mubr.f32.mxu0 %v2310
        %2534 = vmatmul.mubr.f32.gmra.mrb[0].mxu0 %v2309
        %v2535 = vpop.f32.mrb[0].mxu0
        %v2536 = vadd.f32 %v2372, %v2535
        %v2537 = vpop.f32.mrb[0].mxu0
        %2538 = vmatprep.mubr.f32.mxu0 %v2312
        %2539 = vmatmul.mubr.f32.gmra.mrb[0].mxu0 %v2311
        %v2540 = vpop.f32.mrb[0].mxu0
        %v2541 = vadd.f32 %v2372, %v2540
        %v2542 = vpop.f32.mrb[0].mxu0
        %2543 = vmatprep.mubr.f32.mxu0 %v2314
        %2544 = vmatmul.mubr.f32.gmra.mrb[0].mxu0 %v2313
        %v2545 = vpop.f32.mrb[0].mxu0
        %v2546 = vadd.f32 %v2372, %v2545
        %v2547 = vpop.f32.mrb[0].mxu0
        %2548 = vmatprep.mubr.f32.mxu0 %v2316
        %2549 = vmatmul.mubr.f32.gmra.mrb[0].mxu0 %v2315
        %v2550 = vpop.f32.mrb[0].mxu0
        %v2551 = vadd.f32 %v2372, %v2550
        %v2552 = vpop.f32.mrb[0].mxu0
        %2553 = vmatprep.mubr.f32.mxu0 %v2318
        %2554 = vmatmul.mubr.f32.gmra.mrb[0].mxu0 %v2317
        %v2555 = vpop.f32.mrb[0].mxu0
        %v2556 = vadd.f32 %v2372, %v2555
        %v2557 = vpop.f32.mrb[0].mxu0
        %2558 = vmatprep.mubr.f32.mxu0 %v2320
        %2559 = vmatmul.mubr.f32.gmra.mrb[0].mxu0 %v2319
        %v2560 = vpop.f32.mrb[0].mxu0
        %v2561 = vadd.f32 %v2372, %v2560
        %v2562 = vpop.f32.mrb[0].mxu0
        %2563 = vmatprep.mubr.f32.mxu0 %v2322
        %2564 = vmatmul.mubr.f32.gmra.mrb[0].mxu0 %v2321
        %v2565 = vpop.f32.mrb[0].mxu0
        %v2566 = vadd.f32 %v2372, %v2565
        %v2567 = vpop.f32.mrb[0].mxu0
        %2568 = vmatprep.mubr.f32.mxu0 %v2324
        %2569 = vmatmul.mubr.f32.gmra.mrb[0].mxu0 %v2323
        %v2570 = vpop.f32.mrb[0].mxu0
        %v2571 = vadd.f32 %v2372, %v2570
        %v2572 = vpop.f32.mrb[0].mxu0
        %2573 = vmatprep.mubr.f32.mxu0 %v2326
        %2574 = vmatmul.mubr.f32.gmra.mrb[0].mxu0 %v2325
        %v2575 = vpop.f32.mrb[0].mxu0
        %v2576 = vadd.f32 %v2372, %v2575
        %v2577 = vpop.f32.mrb[0].mxu0
        %2578 = vmatprep.mubr.f32.mxu0 %v2328
        %2579 = vmatmul.mubr.f32.gmra.mrb[0].mxu0 %v2327
        %v2580 = vpop.f32.mrb[0].mxu0
        %v2581 = vadd.f32 %v2372, %v2580
        %v2582 = vpop.f32.mrb[0].mxu0
        %2583 = vmatprep.mubr.f32.mxu0 %v2330
        %2584 = vmatmul.mubr.f32.gmra.mrb[0].mxu0 %v2329
        %v2585 = vpop.f32.mrb[0].mxu0
        %v2586 = vadd.f32 %v2372, %v2585
        %v2587 = vpop.f32.mrb[0].mxu0
        %2588 = vmatprep.mubr.f32.mxu0 %v2332
        %2589 = vmatmul.mubr.f32.gmra.mrb[0].mxu0 %v2331
        %v2590 = vpop.f32.mrb[0].mxu0
        %v2591 = vadd.f32 %v2372, %v2590
        %v2592 = vpop.f32.mrb[0].mxu0
        %2593 = vmatprep.mubr.f32.mxu0 %v2334
        %2594 = vmatmul.mubr.f32.gmra.mrb[0].mxu0 %v2333
        %v2595 = vpop.f32.mrb[0].mxu0
        %v2596 = vadd.f32 %v2372, %v2595
        %v2597 = vpop.f32.mrb[0].mxu0
        %2598 = vdwg.mxu0
        %2599 = vst [vmem:[%s271] sm:$0xff] %v2441
        %2600 = vst [vmem:[%s271 + $0x8] sm:$0xff] %v2446
        %2601 = vst [vmem:[%s271 + $0x10] sm:$0xff] %v2451
        %2602 = vst [vmem:[%s271 + $0x18] sm:$0xff] %v2456
        %2603 = vst [vmem:[%s271 + $0x20] sm:$0xff] %v2461
        %2604 = vst [vmem:[%s271 + $0x28] sm:$0xff] %v2466
        %2605 = vst [vmem:[%s271 + $0x30] sm:$0xff] %v2471
        %2606 = vst [vmem:[%s271 + $0x38] sm:$0xff] %v2476
        %2607 = vst [vmem:[%s271 + $0x40] sm:$0xff] %v2481
        %2608 = vst [vmem:[%s271 + $0x48] sm:$0xff] %v2486
        %2609 = vst [vmem:[%s271 + $0x50] sm:$0xff] %v2491
        %2610 = vst [vmem:[%s271 + $0x58] sm:$0xff] %v2496
        %2611 = vst [vmem:[%s271 + $0x60] sm:$0xff] %v2501
        %2612 = vst [vmem:[%s271 + $0x68] sm:$0xff] %v2506
        %2613 = vst [vmem:[%s271 + $0x70] sm:$0xff] %v2511
        %2614 = vst [vmem:[%s271 + $0x78] sm:$0xff] %v2516
        %2615 = vst [vmem:[%s271 + $0x80] sm:$0xff] %v2521
        %2616 = vst [vmem:[%s271 + $0x88] sm:$0xff] %v2526
        %2617 = vst [vmem:[%s271 + $0x90] sm:$0xff] %v2531
        %2618 = vst [vmem:[%s271 + $0x98] sm:$0xff] %v2536
        %2619 = vst [vmem:[%s271 + $0xa0] sm:$0xff] %v2541
        %2620 = vst [vmem:[%s271 + $0xa8] sm:$0xff] %v2546
        %2621 = vst [vmem:[%s271 + $0xb0] sm:$0xff] %v2551
        %2622 = vst [vmem:[%s271 + $0xb8] sm:$0xff] %v2556
        %2623 = vst [vmem:[%s271 + $0xc0] sm:$0xff] %v2561
        %2624 = vst [vmem:[%s271 + $0xc8] sm:$0xff] %v2566
        %2625 = vst [vmem:[%s271 + $0xd0] sm:$0xff] %v2571
        %2626 = vst [vmem:[%s271 + $0xd8] sm:$0xff] %v2576
        %2627 = vst [vmem:[%s271 + $0xe0] sm:$0xff] %v2581
        %2628 = vst [vmem:[%s271 + $0xe8] sm:$0xff] %v2586
        %2629 = vst [vmem:[%s271 + $0xf0] sm:$0xff] %v2591
        %2630 = vst [vmem:[%s271 + $0xf8] sm:$0xff] %v2596
        %s2631 = sand.u32 %s141, 1
        %s2632 = scalar_lea.sflag [#allocation4], %s2631
        %s2633 = sand.u32 %s141, 1
        %s2634 = smul.addr %s2633, 256
        %s2635 = scalar_lea.vmem [#allocation8], %s2634
        // Predicated region
        $region53: #{tpu_custom_call.1} parent=39 // pred_check
          %p2636 = pneg %p151
        $region54: #{tpu_custom_call.1} parent=39 // pred_check_branch
          %2638 = sbr.rel (%p2636) target = $region56
        $region55: #{tpu_custom_call.1} parent=39 // pred_region
          %s2639 = smul.u32 32, %s23
          %s2641 = ssub.s32 4096, 4096
          %2642 = vsyncadd %s2632, %s2641
          %s2643 = smul.addr %s2639, 128
          %s2644 = scalar_lea.hbm %s5, %s2643
          %s2645 = sshll.u32 %s2635, 4
          %s2646 = int_to_ptr.vmem [resolvable:$true] %s2645
          %2651 = dma.vmem_to_hbm [thread:$0]  %s2646, 4096, %s2644, %s2632, 128, 128, 8
        $region56: #{tpu_custom_call.1} parent=39 // pred_fallthru
          _
      $region40: #{tpu_custom_call.1} parent=5 // pred_fallthru
        _
      %p2652 = scmp.le.s32.totalorder 2, %s18
      // Predicated region
      $region57: #{tpu_custom_call.1} parent=5 // pred_check
        %p2653 = pneg %p2652
      $region58: #{tpu_custom_call.1} parent=5 // pred_check_branch
        %2655 = sbr.rel (%p2653) target = $region60
      $region59: #{tpu_custom_call.1} parent=5 // pred_region
        %s2656 = ssub.s32 %s18, 2
        // Predicated region
        $region61: #{tpu_custom_call.1} parent=59 // pred_check
          %p2657 = pneg %p157
        $region62: #{tpu_custom_call.1} parent=59 // pred_check_branch
          %2659 = sbr.rel (%p2657) target = $region64
        $region63: #{tpu_custom_call.1} parent=59 // pred_region
          %s2660 = sand.u32 %s142, 1
          %s2661 = scalar_lea.sflag [#allocation4], %s2660
          %s2662 = sand.u32 %s142, 1
          %s2663 = smul.addr %s2662, 256
          %s2664 = scalar_lea.vmem [#allocation8], %s2663
          %2665 = dma.done %s2661, 4096
        $region64: #{tpu_custom_call.1} parent=59 // pred_fallthru
          _
      $region60: #{tpu_custom_call.1} parent=5 // pred_fallthru
        _
    $region6: #{tpu_custom_call.1} parent=1 // loop_footer
      %s22 = sadd.s32 1, %s18
    $region7: #{tpu_custom_call.1} parent=1 // loop_footer_branch
      %17 = sbr.rel target = $region3
    $region8: #{tpu_custom_call.1} parent=1 // loop_exit
      _
    %2666 = vsyncpa [#allocation3], 1
    %s2667 = scalar_lea.sflag [#allocation3], 1
    %2668 = vsyncpa %s2667, 1
    %2669 = vsyncpa [#allocation6], 1
    %2670 = vsyncpa [#allocation4], 1
    %s2671 = scalar_lea.sflag [#allocation4], 1
    %2672 = vsyncpa %s2671, 1

</llo_original>
